<compile_context>
chip_gen: v7x
topology: tpu7x:2x2x1
jax: 0.10.0
libtpu: 0.0.40
codegen_flags: <defaults>
</compile_context>

<pallas_src>
import numpy as np

import jax
import jax.numpy as jnp
from jax.experimental import pallas as pl
from jax.experimental.pallas import tpu as pltpu


def _ceil_to(v, m):
    return -(-v // m) * m


def _lstm_block_kernel(lens_smem, gx_ref, len_ref, whh_ref,
                       out_ref, hn_ref, cn_ref):
    """One grid step == one (batch-block, time-block) tile of the recurrence.

    lens_smem : (Bp,)          int32 ranked lengths (scalar-prefetched, SMEM)
    gx_ref    : (Tb, Bb, 4Hp)  time-major x @ W_ih^T + (b_ih + b_hh)
    len_ref   : (Bb, 1)        int32 lengths for the per-row mask
    whh_ref   : (Hp, 4Hp)      W_hh^T (resident across the whole grid)
    out_ref   : (Tb, Bb, Hp)   time-major per-timestep hidden outputs
    hn_ref    : (Bb, Hp)       resident f32 recurrent carry h / final h_n
    cn_ref    : (Bb, Hp)       resident f32 recurrent carry c / final c_n
    """
    tb, bb, _ = gx_ref.shape
    hp = whh_ref.shape[0]
    b_blk = pl.program_id(0)
    t_blk = pl.program_id(1)
    t_base = t_blk * tb

    # Reset the resident carry at the start of each batch-block's time sweep.
    @pl.when(t_blk == 0)
    def _init():
        hn_ref[...] = jnp.zeros_like(hn_ref)
        cn_ref[...] = jnp.zeros_like(cn_ref)

    # Lengths are ranked descending, so the first row of this batch block
    # carries the block's maximum length.  (b, t) tiles entirely past it are
    # pure padding: skip all Tb matmuls / transcendentals and emit zeros.
    blk_max_len = lens_smem[b_blk * bb]
    blk_alive = t_base < blk_max_len

    @pl.when(blk_alive)
    def _compute():
        lengths = len_ref[...]                     # (Bb, 1) int32
        whh = whh_ref[...]                         # (Hp, 4Hp), f32 or bf16
        h = hn_ref[...].astype(jnp.float32)        # carries stay f32
        c = cn_ref[...].astype(jnp.float32)

        # Fully unrolled over the Tb timesteps of this block.  Thanks to the
        # time-major block layout, every gx_ref[i] load and out_ref[i] store
        # below is a dense, unmasked (Bb, Hp*) tile (no 1-sublane masked
        # vld/vst), and nothing beyond h/c has to stay live across steps.
        for i in range(tb):
            gates = gx_ref[i].astype(jnp.float32) + jnp.dot(
                h.astype(whh.dtype), whh,
                preferred_element_type=jnp.float32)            # (Bb, 4Hp)

            # Packed gate order (i, f, o, g): one sigmoid over the three
            # contiguous lane-aligned sigmoid gates, one tanh for the rest.
            sig = jax.nn.sigmoid(gates[:, :3 * hp])
            i_g = sig[:, 0 * hp:1 * hp]
            f_g = sig[:, 1 * hp:2 * hp]
            o_g = sig[:, 2 * hp:3 * hp]
            g_g = jnp.tanh(gates[:, 3 * hp:])

            c_new = f_g * c + i_g * g_g
            h_new = o_g * jnp.tanh(c_new)

            # pack_padded_sequence semantics: freeze state and zero output
            # past each row's length (boolean select; robust to junk padding).
            active = (t_base + i) < lengths                    # (Bb, 1) bool
            h = jnp.where(active, h_new, h)
            c = jnp.where(active, c_new, c)
            out_ref[i] = jnp.where(active, h_new, 0.0).astype(out_ref.dtype)

        # Write back the f32 carry once per time-block (resident accumulator).
        hn_ref[...] = h.astype(hn_ref.dtype)
        cn_ref[...] = c.astype(cn_ref.dtype)

    @pl.when(jnp.logical_not(blk_alive))
    def _dead_tile():
        out_ref[...] = jnp.zeros_like(out_ref)


def dynamic_rnn_forward(x, lengths, w_ih, w_hh, b_ih, b_hh, *,
                        t_block=16, b_block=128,
                        compute_dtype=jnp.float32):
    """DynamicRNN.forward (flag_ranked=True, hidden_in=None) with an LSTM.

    x:       (B, T, D) float32, batch-first, already ranked by length desc.
    lengths: (B,) int, with max(lengths) <= T (pack_padded_sequence contract).
    w_ih: (4H, D), w_hh: (4H, H), b_ih/b_hh: (4H,)    [PyTorch i,f,g,o order]
    compute_dtype: storage dtype for W_hh^T and the precomputed gates_x
        (jnp.bfloat16 halves VMEM/HBM traffic and uses the bf16 MXU path);
        carries, gate math and outputs always stay float32.
    Returns (output_pad, (h_n, c_n)) matching the PyTorch shapes.
    """
    B, T, D = x.shape
    H = w_hh.shape[1]

    Hp = _ceil_to(H, 128)                     # lane-aligned hidden size

    # Batch block: feed as many MXU rows as the batch allows (cap 128); keep
    # at least two blocks on the "parallel" axis so v7x's 2 TCs both get work.
    bb = min(b_block, _ceil_to(B, 8))
    if B >= 16 and _ceil_to(B, 8) // bb < 2:
        bb = _ceil_to(_ceil_to(B, 8) // 2, 8)
    Bp = _ceil_to(B, bb)

    # Time block: unrolled per grid step; 16 amortizes per-step overhead for
    # long sequences while collapsing to T for short ones.
    tb = min(t_block, _ceil_to(T, 8))
    Tp = _ceil_to(T, tb)

    # --- Re-pack parameters per gate.  PyTorch order is (i, f, g, o); we pack
    #     (i, f, o, g) so the three sigmoid gates are contiguous, and pad each
    #     gate to the lane-aligned column block [k*Hp, (k+1)*Hp). ---
    perm = jnp.array([0, 1, 3, 2])
    w_ih4 = jnp.pad(w_ih.reshape(4, H, D)[perm], ((0, 0), (0, Hp - H), (0, 0)))
    w_hh4 = jnp.pad(w_hh.reshape(4, H, H)[perm],
                    ((0, 0), (0, Hp - H), (0, Hp - H)))
    bias4 = jnp.pad((b_ih + b_hh).reshape(4, H)[perm], ((0, 0), (0, Hp - H)))

    wih_t = w_ih4.reshape(4 * Hp, D).T                        # (D, 4Hp)
    whh_t = w_hh4.reshape(4 * Hp, Hp).T.astype(compute_dtype)  # (Hp, 4Hp)
    bias = bias4.reshape(1, 1, 4 * Hp)

    # --- Pad activations / lengths (padded rows have length 0 -> stay zero).
    x_p = jnp.pad(x, ((0, Bp - B), (0, Tp - T), (0, 0)))
    lens_i32 = jnp.pad(lengths.astype(jnp.int32), (0, Bp - B))
    len_p = lens_i32.reshape(Bp, 1)

    # --- Input projection hoisted out of the serial recurrence: one large
    #     MXU matmul over all timesteps, emitted TIME-MAJOR so every per-step
    #     kernel access is a dense full tile. ---
    # TODO(synk): for v5e (low HBM BW) fuse this projection into the kernel
    # (resident W_ih^T + per-block x tile) to remove the gx HBM round trip.
    gx = (jnp.einsum('btd,dg->tbg', x_p, wih_t) + bias).astype(compute_dtype)

    nb, nt = Bp // bb, Tp // tb

    # --- VMEM budget from the actual blocks (review: set vmem_limit_bytes).
    cbytes = np.dtype(compute_dtype).itemsize
    obytes = x.dtype.itemsize
    whh_bytes = Hp * 4 * Hp * cbytes
    single_buffer_whh = whh_bytes > (4 << 20)   # constant operand; don't
    whh_bufs = 1 if single_buffer_whh else 2    # double-buffer it when large
    block_bytes = (2 * tb * bb * 4 * Hp * cbytes     # gx (double-buffered)
                   + whh_bufs * whh_bytes            # resident W_hh^T
                   + 2 * tb * bb * Hp * obytes       # out (double-buffered)
                   + 2 * 2 * bb * Hp * obytes        # hn + cn carries
                   + 2 * bb * 4)                     # lengths
    # Scoped default is 16 MiB (v5e) / 32 MiB (v6e,v7x); stay <= v7x's 64 MiB.
    vmem_limit = int(min(max(2 * block_bytes, 32 << 20), 64 << 20))
    # TODO(synk): for Hp >= ~2048 even a single-buffered bf16 W_hh^T outgrows
    # v7x VMEM; tile the 4Hp gate axis over an extra 'arbitrary' grid axis.

    whh_kwargs = {}
    if single_buffer_whh:
        whh_kwargs["pipeline_mode"] = pl.Buffered(1)

    out_p, hn_p, cn_p = pl.pallas_call(
        _lstm_block_kernel,
        out_shape=(jax.ShapeDtypeStruct((Tp, Bp, Hp), x.dtype),
                   jax.ShapeDtypeStruct((Bp, Hp), x.dtype),
                   jax.ShapeDtypeStruct((Bp, Hp), x.dtype)),
        grid_spec=pltpu.PrefetchScalarGridSpec(
            num_scalar_prefetch=1,                  # ranked lengths -> SMEM
            grid=(nb, nt),
            in_specs=[
                pl.BlockSpec((tb, bb, 4 * Hp),
                             lambda b, t, lens: (t, b, 0)),     # gates_x
                pl.BlockSpec((bb, 1),
                             lambda b, t, lens: (b, 0)),        # lengths
                pl.BlockSpec((Hp, 4 * Hp),
                             lambda b, t, lens: (0, 0),
                             **whh_kwargs),                     # W_hh^T
            ],
            out_specs=(
                pl.BlockSpec((tb, bb, Hp),
                             lambda b, t, lens: (t, b, 0)),     # per-step out
                pl.BlockSpec((bb, Hp), lambda b, t, lens: (b, 0)),  # h carry
                pl.BlockSpec((bb, Hp), lambda b, t, lens: (b, 0)),  # c carry
            ),
        ),
        compiler_params=pltpu.CompilerParams(
            dimension_semantics=("parallel", "arbitrary"),
            vmem_limit_bytes=vmem_limit),
    )(lens_i32, gx, len_p, whh_t)

    # Strip padding; single batch-first transpose of the H-wide output in XLA
    # (traded for fully dense, unmasked stores inside the serial recurrence).
    output_pad = jnp.transpose(out_p[:T, :B, :H], (1, 0, 2))
    hidden = (hn_p[:B, :H][None], cn_p[:B, :H][None])           # (1, B, H)
    return output_pad, hidden


def _lstm_reference(x, lengths, w_ih, w_hh, b_ih, b_hh):
    """Pure-JAX reference replicating packed-sequence LSTM semantics."""
    B, T, D = x.shape
    H = w_hh.shape[1]

    def step(carry, t):
        h, c = carry
        x_t = x[:, t, :]
        gates = x_t @ w_ih.T + h @ w_hh.T + b_ih + b_hh
        i_g = jax.nn.sigmoid(gates[:, 0 * H:1 * H])
        f_g = jax.nn.sigmoid(gates[:, 1 * H:2 * H])
        g_g = jnp.tanh(gates[:, 2 * H:3 * H])
        o_g = jax.nn.sigmoid(gates[:, 3 * H:4 * H])
        c_new = f_g * c + i_g * g_g
        h_new = o_g * jnp.tanh(c_new)
        mask = (t < lengths)[:, None]
        h2 = jnp.where(mask, h_new, h)
        c2 = jnp.where(mask, c_new, c)
        return (h2, c2), jnp.where(mask, h_new, 0.0)

    init = (jnp.zeros((B, H), x.dtype), jnp.zeros((B, H), x.dtype))
    (h_n, c_n), outs = jax.lax.scan(step, init, jnp.arange(T))
    return jnp.transpose(outs, (1, 0, 2)), (h_n[None], c_n[None])


if __name__ == "__main__":
    # Small shapes consistent with DynamicRNN(input_size=16, hidden_size=32)
    B, T, D, H = 2, 8, 16, 32

    key = jax.random.PRNGKey(0)
    kx, k1, k2, k3, k4 = jax.random.split(key, 5)

    x = jax.random.normal(kx, (B, T, D), dtype=jnp.float32)
    # lengths ranked in descending order (flag_ranked=True path), max <= T
    lengths = jnp.array([8, 5], dtype=jnp.int32)

    # Deterministic PyTorch-style init: U(-1/sqrt(H), 1/sqrt(H))
    bound = 1.0 / (H ** 0.5)
    w_ih = jax.random.uniform(k1, (4 * H, D), jnp.float32, -bound, bound)
    w_hh = jax.random.uniform(k2, (4 * H, H), jnp.float32, -bound, bound)
    b_ih = jax.random.uniform(k3, (4 * H,), jnp.float32, -bound, bound)
    b_hh = jax.random.uniform(k4, (4 * H,), jnp.float32, -bound, bound)

    out_ref_, (h_ref, c_ref) = _lstm_reference(x, lengths, w_ih, w_hh,
                                               b_ih, b_hh)

    # Full-precision path: matches the reference to tight tolerance.
    out, (h_n, c_n) = dynamic_rnn_forward(x, lengths, w_ih, w_hh, b_ih, b_hh)
    jax.block_until_ready((out, h_n, c_n))
    assert out.shape == (B, T, H)
    assert h_n.shape == (1, B, H) and c_n.shape == (1, B, H)
    assert jnp.allclose(out, out_ref_, rtol=1e-5, atol=1e-5)
    assert jnp.allclose(h_n, h_ref, rtol=1e-5, atol=1e-5)
    assert jnp.allclose(c_n, c_ref, rtol=1e-5, atol=1e-5)

    # bfloat16 weight / gates-x storage path (f32 carries + gate math):
    # looser tolerance, exercises the bf16 MXU option from the review.
    out_bf, (h_bf, c_bf) = dynamic_rnn_forward(
        x, lengths, w_ih, w_hh, b_ih, b_hh, compute_dtype=jnp.bfloat16)
    jax.block_until_ready((out_bf, h_bf, c_bf))
    assert jnp.allclose(out_bf, out_ref_, rtol=5e-2, atol=5e-2)
    assert jnp.allclose(h_bf, h_ref, rtol=5e-2, atol=5e-2)
    assert jnp.allclose(c_bf, c_ref, rtol=5e-2, atol=5e-2)

    print("KERNEL_OK")
</pallas_src>

<mosaic_0001>
module attributes {stable_mosaic.version = 11 : i64} {
  func.func @_lstm_block_kernel(%arg0: i32, %arg1: i32, %arg2: memref<8xi32, #tpu.memory_space<smem>>, %arg3: memref<8x8x512xf32, #tpu.memory_space<vmem>>, %arg4: memref<8x1xi32, #tpu.memory_space<vmem>>, %arg5: memref<128x512xf32, #tpu.memory_space<vmem>>, %arg6: memref<8x8x128xf32, #tpu.memory_space<vmem>>, %arg7: memref<8x128xf32, #tpu.memory_space<vmem>>, %arg8: memref<8x128xf32, #tpu.memory_space<vmem>>) attributes {dimension_semantics = [#tpu.dimension_semantics<parallel>, #tpu.dimension_semantics<arbitrary>], iteration_bounds = array<i64: 1, 1>, scalar_prefetch = 1 : i64, scratch_operands = 0 : i64, tpu.core_type = #tpu.core_type<tc>, window_params = [{transform_indices = @transform_0, window_bounds = array<i64: 8, 8, 512>}, {transform_indices = @transform_1, window_bounds = array<i64: 8, 1>}, {pipeline_mode = #tpu.pipeline_mode<synchronous>, transform_indices = @transform_2, window_bounds = array<i64: 128, 512>}, {transform_indices = @transform_3, window_bounds = array<i64: 8, 8, 128>}, {transform_indices = @transform_4, window_bounds = array<i64: 8, 128>}, {transform_indices = @transform_5, window_bounds = array<i64: 8, 128>}]} {
    %c8_i32 = arith.constant 8 : i32
    %0 = arith.muli %arg1, %c8_i32 : i32
    %c0_i32 = arith.constant 0 : i32
    %1 = arith.cmpi eq, %arg1, %c0_i32 : i32
    %2 = arith.extui %1 : i1 to i32
    %c0_i32_0 = arith.constant 0 : i32
    %3 = arith.cmpi ne, %2, %c0_i32_0 : i32
    scf.if %3 {
      %cst = arith.constant 0.000000e+00 : f32
      %13 = vector.broadcast %cst : f32 to vector<8x128xf32>
      %c0 = arith.constant 0 : index
      %c0_4 = arith.constant 0 : index
      %14 = vector.load %arg7[%c0, %c0_4] : memref<8x128xf32, #tpu.memory_space<vmem>>, vector<8x128xf32>
      tpu.vector_store %arg7[%c0, %c0_4], %13 {strides = array<i32>} : memref<8x128xf32, #tpu.memory_space<vmem>>, vector<8x128xf32>,
      %cst_5 = arith.constant 0.000000e+00 : f32
      %15 = vector.broadcast %cst_5 : f32 to vector<8x128xf32>
      %c0_6 = arith.constant 0 : index
      %c0_7 = arith.constant 0 : index
      %16 = vector.load %arg8[%c0_6, %c0_7] : memref<8x128xf32, #tpu.memory_space<vmem>>, vector<8x128xf32>
      tpu.vector_store %arg8[%c0_6, %c0_7], %15 {strides = array<i32>} : memref<8x128xf32, #tpu.memory_space<vmem>>, vector<8x128xf32>,
    } else {
    }
    %c8_i32_1 = arith.constant 8 : i32
    %4 = arith.muli %arg0, %c8_i32_1 : i32
    %5 = arith.index_cast %4 : i32 to index
    %6 = memref.load %arg2[%5] : memref<8xi32, #tpu.memory_space<smem>>
    %7 = arith.cmpi slt, %0, %6 : i32
    %8 = arith.extui %7 : i1 to i32
    %c0_i32_2 = arith.constant 0 : i32
    %9 = arith.cmpi ne, %8, %c0_i32_2 : i32
    scf.if %9 {
      %c0 = arith.constant 0 : index
      %c0_4 = arith.constant 0 : index
      %13 = vector.load %arg4[%c0, %c0_4] : memref<8x1xi32, #tpu.memory_space<vmem>>, vector<8x1xi32>
      %c0_5 = arith.constant 0 : index
      %c0_6 = arith.constant 0 : index
      %14 = vector.load %arg5[%c0_5, %c0_6] : memref<128x512xf32, #tpu.memory_space<vmem>>, vector<128x512xf32>
      %c0_7 = arith.constant 0 : index
      %c0_8 = arith.constant 0 : index
      %15 = vector.load %arg7[%c0_7, %c0_8] : memref<8x128xf32, #tpu.memory_space<vmem>>, vector<8x128xf32>
      %c0_9 = arith.constant 0 : index
      %c0_10 = arith.constant 0 : index
      %16 = vector.load %arg8[%c0_9, %c0_10] : memref<8x128xf32, #tpu.memory_space<vmem>>, vector<8x128xf32>
      %c0_11 = arith.constant 0 : index
      %c0_12 = arith.constant 0 : index
      %c0_13 = arith.constant 0 : index
      %17 = vector.load %arg3[%c0_11, %c0_12, %c0_13] : memref<8x8x512xf32, #tpu.memory_space<vmem>>, vector<1x8x512xf32>
      %18 = vector.shape_cast %17 : vector<1x8x512xf32> to vector<8x512xf32>
      %cst = arith.constant dense<0.000000e+00> : vector<8x512xf32>
      %19 = tpu.matmul %15, %14, %cst {dimension_numbers = #tpu.dot_dimension_numbers<[1], [0], [0], [1], [0, 0, 1, 1], [], []>} : vector<8x128xf32>, vector<128x512xf32>, vector<8x512xf32> -> vector<8x512xf32>
      %20 = arith.addf %18, %19 : vector<8x512xf32>
      %21 = vector.extract_strided_slice %20 {offsets = [0, 0], sizes = [8, 384], strides = [1, 1]} : vector<8x512xf32> to vector<8x384xf32>
      %22 = arith.negf %21 : vector<8x384xf32>
      %23 = math.exp %22 : vector<8x384xf32>
      %cst_14 = arith.constant 1.000000e+00 : f32
      %24 = vector.broadcast %cst_14 : f32 to vector<8x384xf32>
      %25 = arith.addf %24, %23 : vector<8x384xf32>
      %26 = arith.divf %24, %25 : vector<8x384xf32>
      %27 = vector.extract_strided_slice %26 {offsets = [0, 0], sizes = [8, 128], strides = [1, 1]} : vector<8x384xf32> to vector<8x128xf32>
      %28 = vector.extract_strided_slice %26 {offsets = [0, 128], sizes = [8, 128], strides = [1, 1]} : vector<8x384xf32> to vector<8x128xf32>
      %29 = vector.extract_strided_slice %26 {offsets = [0, 256], sizes = [8, 128], strides = [1, 1]} : vector<8x384xf32> to vector<8x128xf32>
      %30 = vector.extract_strided_slice %20 {offsets = [0, 384], sizes = [8, 128], strides = [1, 1]} : vector<8x512xf32> to vector<8x128xf32>
      %31 = math.tanh %30 : vector<8x128xf32>
      %32 = arith.mulf %28, %16 : vector<8x128xf32>
      %33 = arith.mulf %27, %31 : vector<8x128xf32>
      %34 = arith.addf %32, %33 : vector<8x128xf32>
      %35 = math.tanh %34 : vector<8x128xf32>
      %36 = arith.mulf %29, %35 : vector<8x128xf32>
      %c0_i32_15 = arith.constant 0 : i32
      %37 = arith.addi %0, %c0_i32_15 : i32
      %38 = vector.broadcast %37 : i32 to vector<8x1xi32>
      %39 = arith.cmpi slt, %38, %13 : vector<8x1xi32>
      %40 = vector.shape_cast %39 : vector<8x1xi1> to vector<8x1xi1>
      %41 = vector.broadcast %40 : vector<8x1xi1> to vector<8x128xi1>
      %42 = arith.select %41, %36, %15 : vector<8x128xi1>, vector<8x128xf32>
      %43 = vector.shape_cast %39 : vector<8x1xi1> to vector<8x1xi1>
      %44 = vector.broadcast %43 : vector<8x1xi1> to vector<8x128xi1>
      %45 = arith.select %44, %34, %16 : vector<8x128xi1>, vector<8x128xf32>
      %cst_16 = arith.constant 0.000000e+00 : f32
      %46 = vector.shape_cast %39 : vector<8x1xi1> to vector<8x1xi1>
      %47 = vector.broadcast %46 : vector<8x1xi1> to vector<8x128xi1>
      %48 = vector.broadcast %cst_16 : f32 to vector<8x128xf32>
      %49 = arith.select %47, %36, %48 : vector<8x128xi1>, vector<8x128xf32>
      %c0_17 = arith.constant 0 : index
      %c0_18 = arith.constant 0 : index
      %c0_19 = arith.constant 0 : index
      %50 = vector.load %arg6[%c0_17, %c0_18, %c0_19] : memref<8x8x128xf32, #tpu.memory_space<vmem>>, vector<1x8x128xf32>
      %51 = vector.shape_cast %50 : vector<1x8x128xf32> to vector<8x128xf32>
      %52 = vector.shape_cast %49 : vector<8x128xf32> to vector<1x8x128xf32>
      tpu.vector_store %arg6[%c0_17, %c0_18, %c0_19], %52 {strides = array<i32>} : memref<8x8x128xf32, #tpu.memory_space<vmem>>, vector<1x8x128xf32>,
      %c1 = arith.constant 1 : index
      %c0_20 = arith.constant 0 : index
      %c0_21 = arith.constant 0 : index
      %53 = vector.load %arg3[%c1, %c0_20, %c0_21] : memref<8x8x512xf32, #tpu.memory_space<vmem>>, vector<1x8x512xf32>
      %54 = vector.shape_cast %53 : vector<1x8x512xf32> to vector<8x512xf32>
      %cst_22 = arith.constant dense<0.000000e+00> : vector<8x512xf32>
      %55 = tpu.matmul %42, %14, %cst_22 {dimension_numbers = #tpu.dot_dimension_numbers<[1], [0], [0], [1], [0, 0, 1, 1], [], []>} : vector<8x128xf32>, vector<128x512xf32>, vector<8x512xf32> -> vector<8x512xf32>
      %56 = arith.addf %54, %55 : vector<8x512xf32>
      %57 = vector.extract_strided_slice %56 {offsets = [0, 0], sizes = [8, 384], strides = [1, 1]} : vector<8x512xf32> to vector<8x384xf32>
      %58 = arith.negf %57 : vector<8x384xf32>
      %59 = math.exp %58 : vector<8x384xf32>
      %cst_23 = arith.constant 1.000000e+00 : f32
      %60 = vector.broadcast %cst_23 : f32 to vector<8x384xf32>
      %61 = arith.addf %60, %59 : vector<8x384xf32>
      %62 = arith.divf %60, %61 : vector<8x384xf32>
      %63 = vector.extract_strided_slice %62 {offsets = [0, 0], sizes = [8, 128], strides = [1, 1]} : vector<8x384xf32> to vector<8x128xf32>
      %64 = vector.extract_strided_slice %62 {offsets = [0, 128], sizes = [8, 128], strides = [1, 1]} : vector<8x384xf32> to vector<8x128xf32>
      %65 = vector.extract_strided_slice %62 {offsets = [0, 256], sizes = [8, 128], strides = [1, 1]} : vector<8x384xf32> to vector<8x128xf32>
      %66 = vector.extract_strided_slice %56 {offsets = [0, 384], sizes = [8, 128], strides = [1, 1]} : vector<8x512xf32> to vector<8x128xf32>
      %67 = math.tanh %66 : vector<8x128xf32>
      %68 = arith.mulf %64, %45 : vector<8x128xf32>
      %69 = arith.mulf %63, %67 : vector<8x128xf32>
      %70 = arith.addf %68, %69 : vector<8x128xf32>
      %71 = math.tanh %70 : vector<8x128xf32>
      %72 = arith.mulf %65, %71 : vector<8x128xf32>
      %c1_i32 = arith.constant 1 : i32
      %73 = arith.addi %0, %c1_i32 : i32
      %74 = vector.broadcast %73 : i32 to vector<8x1xi32>
      %75 = arith.cmpi slt, %74, %13 : vector<8x1xi32>
      %76 = vector.shape_cast %75 : vector<8x1xi1> to vector<8x1xi1>
      %77 = vector.broadcast %76 : vector<8x1xi1> to vector<8x128xi1>
      %78 = arith.select %77, %72, %42 : vector<8x128xi1>, vector<8x128xf32>
      %79 = vector.shape_cast %75 : vector<8x1xi1> to vector<8x1xi1>
      %80 = vector.broadcast %79 : vector<8x1xi1> to vector<8x128xi1>
      %81 = arith.select %80, %70, %45 : vector<8x128xi1>, vector<8x128xf32>
      %cst_24 = arith.constant 0.000000e+00 : f32
      %82 = vector.shape_cast %75 : vector<8x1xi1> to vector<8x1xi1>
      %83 = vector.broadcast %82 : vector<8x1xi1> to vector<8x128xi1>
      %84 = vector.broadcast %cst_24 : f32 to vector<8x128xf32>
      %85 = arith.select %83, %72, %84 : vector<8x128xi1>, vector<8x128xf32>
      %c1_25 = arith.constant 1 : index
      %c0_26 = arith.constant 0 : index
      %c0_27 = arith.constant 0 : index
      %86 = vector.load %arg6[%c1_25, %c0_26, %c0_27] : memref<8x8x128xf32, #tpu.memory_space<vmem>>, vector<1x8x128xf32>
      %87 = vector.shape_cast %86 : vector<1x8x128xf32> to vector<8x128xf32>
      %88 = vector.shape_cast %85 : vector<8x128xf32> to vector<1x8x128xf32>
      tpu.vector_store %arg6[%c1_25, %c0_26, %c0_27], %88 {strides = array<i32>} : memref<8x8x128xf32, #tpu.memory_space<vmem>>, vector<1x8x128xf32>,
      %c2 = arith.constant 2 : index
      %c0_28 = arith.constant 0 : index
      %c0_29 = arith.constant 0 : index
      %89 = vector.load %arg3[%c2, %c0_28, %c0_29] : memref<8x8x512xf32, #tpu.memory_space<vmem>>, vector<1x8x512xf32>
      %90 = vector.shape_cast %89 : vector<1x8x512xf32> to vector<8x512xf32>
      %cst_30 = arith.constant dense<0.000000e+00> : vector<8x512xf32>
      %91 = tpu.matmul %78, %14, %cst_30 {dimension_numbers = #tpu.dot_dimension_numbers<[1], [0], [0], [1], [0, 0, 1, 1], [], []>} : vector<8x128xf32>, vector<128x512xf32>, vector<8x512xf32> -> vector<8x512xf32>
      %92 = arith.addf %90, %91 : vector<8x512xf32>
      %93 = vector.extract_strided_slice %92 {offsets = [0, 0], sizes = [8, 384], strides = [1, 1]} : vector<8x512xf32> to vector<8x384xf32>
      %94 = arith.negf %93 : vector<8x384xf32>
      %95 = math.exp %94 : vector<8x384xf32>
      %cst_31 = arith.constant 1.000000e+00 : f32
      %96 = vector.broadcast %cst_31 : f32 to vector<8x384xf32>
      %97 = arith.addf %96, %95 : vector<8x384xf32>
      %98 = arith.divf %96, %97 : vector<8x384xf32>
      %99 = vector.extract_strided_slice %98 {offsets = [0, 0], sizes = [8, 128], strides = [1, 1]} : vector<8x384xf32> to vector<8x128xf32>
      %100 = vector.extract_strided_slice %98 {offsets = [0, 128], sizes = [8, 128], strides = [1, 1]} : vector<8x384xf32> to vector<8x128xf32>
      %101 = vector.extract_strided_slice %98 {offsets = [0, 256], sizes = [8, 128], strides = [1, 1]} : vector<8x384xf32> to vector<8x128xf32>
      %102 = vector.extract_strided_slice %92 {offsets = [0, 384], sizes = [8, 128], strides = [1, 1]} : vector<8x512xf32> to vector<8x128xf32>
      %103 = math.tanh %102 : vector<8x128xf32>
      %104 = arith.mulf %100, %81 : vector<8x128xf32>
      %105 = arith.mulf %99, %103 : vector<8x128xf32>
      %106 = arith.addf %104, %105 : vector<8x128xf32>
      %107 = math.tanh %106 : vector<8x128xf32>
      %108 = arith.mulf %101, %107 : vector<8x128xf32>
      %c2_i32 = arith.constant 2 : i32
      %109 = arith.addi %0, %c2_i32 : i32
      %110 = vector.broadcast %109 : i32 to vector<8x1xi32>
      %111 = arith.cmpi slt, %110, %13 : vector<8x1xi32>
      %112 = vector.shape_cast %111 : vector<8x1xi1> to vector<8x1xi1>
      %113 = vector.broadcast %112 : vector<8x1xi1> to vector<8x128xi1>
      %114 = arith.select %113, %108, %78 : vector<8x128xi1>, vector<8x128xf32>
      %115 = vector.shape_cast %111 : vector<8x1xi1> to vector<8x1xi1>
      %116 = vector.broadcast %115 : vector<8x1xi1> to vector<8x128xi1>
      %117 = arith.select %116, %106, %81 : vector<8x128xi1>, vector<8x128xf32>
      %cst_32 = arith.constant 0.000000e+00 : f32
      %118 = vector.shape_cast %111 : vector<8x1xi1> to vector<8x1xi1>
      %119 = vector.broadcast %118 : vector<8x1xi1> to vector<8x128xi1>
      %120 = vector.broadcast %cst_32 : f32 to vector<8x128xf32>
      %121 = arith.select %119, %108, %120 : vector<8x128xi1>, vector<8x128xf32>
      %c2_33 = arith.constant 2 : index
      %c0_34 = arith.constant 0 : index
      %c0_35 = arith.constant 0 : index
      %122 = vector.load %arg6[%c2_33, %c0_34, %c0_35] : memref<8x8x128xf32, #tpu.memory_space<vmem>>, vector<1x8x128xf32>
      %123 = vector.shape_cast %122 : vector<1x8x128xf32> to vector<8x128xf32>
      %124 = vector.shape_cast %121 : vector<8x128xf32> to vector<1x8x128xf32>
      tpu.vector_store %arg6[%c2_33, %c0_34, %c0_35], %124 {strides = array<i32>} : memref<8x8x128xf32, #tpu.memory_space<vmem>>, vector<1x8x128xf32>,
      %c3 = arith.constant 3 : index
      %c0_36 = arith.constant 0 : index
      %c0_37 = arith.constant 0 : index
      %125 = vector.load %arg3[%c3, %c0_36, %c0_37] : memref<8x8x512xf32, #tpu.memory_space<vmem>>, vector<1x8x512xf32>
      %126 = vector.shape_cast %125 : vector<1x8x512xf32> to vector<8x512xf32>
      %cst_38 = arith.constant dense<0.000000e+00> : vector<8x512xf32>
      %127 = tpu.matmul %114, %14, %cst_38 {dimension_numbers = #tpu.dot_dimension_numbers<[1], [0], [0], [1], [0, 0, 1, 1], [], []>} : vector<8x128xf32>, vector<128x512xf32>, vector<8x512xf32> -> vector<8x512xf32>
      %128 = arith.addf %126, %127 : vector<8x512xf32>
      %129 = vector.extract_strided_slice %128 {offsets = [0, 0], sizes = [8, 384], strides = [1, 1]} : vector<8x512xf32> to vector<8x384xf32>
      %130 = arith.negf %129 : vector<8x384xf32>
      %131 = math.exp %130 : vector<8x384xf32>
      %cst_39 = arith.constant 1.000000e+00 : f32
      %132 = vector.broadcast %cst_39 : f32 to vector<8x384xf32>
      %133 = arith.addf %132, %131 : vector<8x384xf32>
      %134 = arith.divf %132, %133 : vector<8x384xf32>
      %135 = vector.extract_strided_slice %134 {offsets = [0, 0], sizes = [8, 128], strides = [1, 1]} : vector<8x384xf32> to vector<8x128xf32>
      %136 = vector.extract_strided_slice %134 {offsets = [0, 128], sizes = [8, 128], strides = [1, 1]} : vector<8x384xf32> to vector<8x128xf32>
      %137 = vector.extract_strided_slice %134 {offsets = [0, 256], sizes = [8, 128], strides = [1, 1]} : vector<8x384xf32> to vector<8x128xf32>
      %138 = vector.extract_strided_slice %128 {offsets = [0, 384], sizes = [8, 128], strides = [1, 1]} : vector<8x512xf32> to vector<8x128xf32>
      %139 = math.tanh %138 : vector<8x128xf32>
      %140 = arith.mulf %136, %117 : vector<8x128xf32>
      %141 = arith.mulf %135, %139 : vector<8x128xf32>
      %142 = arith.addf %140, %141 : vector<8x128xf32>
      %143 = math.tanh %142 : vector<8x128xf32>
      %144 = arith.mulf %137, %143 : vector<8x128xf32>
      %c3_i32 = arith.constant 3 : i32
      %145 = arith.addi %0, %c3_i32 : i32
      %146 = vector.broadcast %145 : i32 to vector<8x1xi32>
      %147 = arith.cmpi slt, %146, %13 : vector<8x1xi32>
      %148 = vector.shape_cast %147 : vector<8x1xi1> to vector<8x1xi1>
      %149 = vector.broadcast %148 : vector<8x1xi1> to vector<8x128xi1>
      %150 = arith.select %149, %144, %114 : vector<8x128xi1>, vector<8x128xf32>
      %151 = vector.shape_cast %147 : vector<8x1xi1> to vector<8x1xi1>
      %152 = vector.broadcast %151 : vector<8x1xi1> to vector<8x128xi1>
      %153 = arith.select %152, %142, %117 : vector<8x128xi1>, vector<8x128xf32>
      %cst_40 = arith.constant 0.000000e+00 : f32
      %154 = vector.shape_cast %147 : vector<8x1xi1> to vector<8x1xi1>
      %155 = vector.broadcast %154 : vector<8x1xi1> to vector<8x128xi1>
      %156 = vector.broadcast %cst_40 : f32 to vector<8x128xf32>
      %157 = arith.select %155, %144, %156 : vector<8x128xi1>, vector<8x128xf32>
      %c3_41 = arith.constant 3 : index
      %c0_42 = arith.constant 0 : index
      %c0_43 = arith.constant 0 : index
      %158 = vector.load %arg6[%c3_41, %c0_42, %c0_43] : memref<8x8x128xf32, #tpu.memory_space<vmem>>, vector<1x8x128xf32>
      %159 = vector.shape_cast %158 : vector<1x8x128xf32> to vector<8x128xf32>
      %160 = vector.shape_cast %157 : vector<8x128xf32> to vector<1x8x128xf32>
      tpu.vector_store %arg6[%c3_41, %c0_42, %c0_43], %160 {strides = array<i32>} : memref<8x8x128xf32, #tpu.memory_space<vmem>>, vector<1x8x128xf32>,
      %c4 = arith.constant 4 : index
      %c0_44 = arith.constant 0 : index
      %c0_45 = arith.constant 0 : index
      %161 = vector.load %arg3[%c4, %c0_44, %c0_45] : memref<8x8x512xf32, #tpu.memory_space<vmem>>, vector<1x8x512xf32>
      %162 = vector.shape_cast %161 : vector<1x8x512xf32> to vector<8x512xf32>
      %cst_46 = arith.constant dense<0.000000e+00> : vector<8x512xf32>
      %163 = tpu.matmul %150, %14, %cst_46 {dimension_numbers = #tpu.dot_dimension_numbers<[1], [0], [0], [1], [0, 0, 1, 1], [], []>} : vector<8x128xf32>, vector<128x512xf32>, vector<8x512xf32> -> vector<8x512xf32>
      %164 = arith.addf %162, %163 : vector<8x512xf32>
      %165 = vector.extract_strided_slice %164 {offsets = [0, 0], sizes = [8, 384], strides = [1, 1]} : vector<8x512xf32> to vector<8x384xf32>
      %166 = arith.negf %165 : vector<8x384xf32>
      %167 = math.exp %166 : vector<8x384xf32>
      %cst_47 = arith.constant 1.000000e+00 : f32
      %168 = vector.broadcast %cst_47 : f32 to vector<8x384xf32>
      %169 = arith.addf %168, %167 : vector<8x384xf32>
      %170 = arith.divf %168, %169 : vector<8x384xf32>
      %171 = vector.extract_strided_slice %170 {offsets = [0, 0], sizes = [8, 128], strides = [1, 1]} : vector<8x384xf32> to vector<8x128xf32>
      %172 = vector.extract_strided_slice %170 {offsets = [0, 128], sizes = [8, 128], strides = [1, 1]} : vector<8x384xf32> to vector<8x128xf32>
      %173 = vector.extract_strided_slice %170 {offsets = [0, 256], sizes = [8, 128], strides = [1, 1]} : vector<8x384xf32> to vector<8x128xf32>
      %174 = vector.extract_strided_slice %164 {offsets = [0, 384], sizes = [8, 128], strides = [1, 1]} : vector<8x512xf32> to vector<8x128xf32>
      %175 = math.tanh %174 : vector<8x128xf32>
      %176 = arith.mulf %172, %153 : vector<8x128xf32>
      %177 = arith.mulf %171, %175 : vector<8x128xf32>
      %178 = arith.addf %176, %177 : vector<8x128xf32>
      %179 = math.tanh %178 : vector<8x128xf32>
      %180 = arith.mulf %173, %179 : vector<8x128xf32>
      %c4_i32 = arith.constant 4 : i32
      %181 = arith.addi %0, %c4_i32 : i32
      %182 = vector.broadcast %181 : i32 to vector<8x1xi32>
      %183 = arith.cmpi slt, %182, %13 : vector<8x1xi32>
      %184 = vector.shape_cast %183 : vector<8x1xi1> to vector<8x1xi1>
      %185 = vector.broadcast %184 : vector<8x1xi1> to vector<8x128xi1>
      %186 = arith.select %185, %180, %150 : vector<8x128xi1>, vector<8x128xf32>
      %187 = vector.shape_cast %183 : vector<8x1xi1> to vector<8x1xi1>
      %188 = vector.broadcast %187 : vector<8x1xi1> to vector<8x128xi1>
      %189 = arith.select %188, %178, %153 : vector<8x128xi1>, vector<8x128xf32>
      %cst_48 = arith.constant 0.000000e+00 : f32
      %190 = vector.shape_cast %183 : vector<8x1xi1> to vector<8x1xi1>
      %191 = vector.broadcast %190 : vector<8x1xi1> to vector<8x128xi1>
      %192 = vector.broadcast %cst_48 : f32 to vector<8x128xf32>
      %193 = arith.select %191, %180, %192 : vector<8x128xi1>, vector<8x128xf32>
      %c4_49 = arith.constant 4 : index
      %c0_50 = arith.constant 0 : index
      %c0_51 = arith.constant 0 : index
      %194 = vector.load %arg6[%c4_49, %c0_50, %c0_51] : memref<8x8x128xf32, #tpu.memory_space<vmem>>, vector<1x8x128xf32>
      %195 = vector.shape_cast %194 : vector<1x8x128xf32> to vector<8x128xf32>
      %196 = vector.shape_cast %193 : vector<8x128xf32> to vector<1x8x128xf32>
      tpu.vector_store %arg6[%c4_49, %c0_50, %c0_51], %196 {strides = array<i32>} : memref<8x8x128xf32, #tpu.memory_space<vmem>>, vector<1x8x128xf32>,
      %c5 = arith.constant 5 : index
      %c0_52 = arith.constant 0 : index
      %c0_53 = arith.constant 0 : index
      %197 = vector.load %arg3[%c5, %c0_52, %c0_53] : memref<8x8x512xf32, #tpu.memory_space<vmem>>, vector<1x8x512xf32>
      %198 = vector.shape_cast %197 : vector<1x8x512xf32> to vector<8x512xf32>
      %cst_54 = arith.constant dense<0.000000e+00> : vector<8x512xf32>
      %199 = tpu.matmul %186, %14, %cst_54 {dimension_numbers = #tpu.dot_dimension_numbers<[1], [0], [0], [1], [0, 0, 1, 1], [], []>} : vector<8x128xf32>, vector<128x512xf32>, vector<8x512xf32> -> vector<8x512xf32>
      %200 = arith.addf %198, %199 : vector<8x512xf32>
      %201 = vector.extract_strided_slice %200 {offsets = [0, 0], sizes = [8, 384], strides = [1, 1]} : vector<8x512xf32> to vector<8x384xf32>
      %202 = arith.negf %201 : vector<8x384xf32>
      %203 = math.exp %202 : vector<8x384xf32>
      %cst_55 = arith.constant 1.000000e+00 : f32
      %204 = vector.broadcast %cst_55 : f32 to vector<8x384xf32>
      %205 = arith.addf %204, %203 : vector<8x384xf32>
      %206 = arith.divf %204, %205 : vector<8x384xf32>
      %207 = vector.extract_strided_slice %206 {offsets = [0, 0], sizes = [8, 128], strides = [1, 1]} : vector<8x384xf32> to vector<8x128xf32>
      %208 = vector.extract_strided_slice %206 {offsets = [0, 128], sizes = [8, 128], strides = [1, 1]} : vector<8x384xf32> to vector<8x128xf32>
      %209 = vector.extract_strided_slice %206 {offsets = [0, 256], sizes = [8, 128], strides = [1, 1]} : vector<8x384xf32> to vector<8x128xf32>
      %210 = vector.extract_strided_slice %200 {offsets = [0, 384], sizes = [8, 128], strides = [1, 1]} : vector<8x512xf32> to vector<8x128xf32>
      %211 = math.tanh %210 : vector<8x128xf32>
      %212 = arith.mulf %208, %189 : vector<8x128xf32>
      %213 = arith.mulf %207, %211 : vector<8x128xf32>
      %214 = arith.addf %212, %213 : vector<8x128xf32>
      %215 = math.tanh %214 : vector<8x128xf32>
      %216 = arith.mulf %209, %215 : vector<8x128xf32>
      %c5_i32 = arith.constant 5 : i32
      %217 = arith.addi %0, %c5_i32 : i32
      %218 = vector.broadcast %217 : i32 to vector<8x1xi32>
      %219 = arith.cmpi slt, %218, %13 : vector<8x1xi32>
      %220 = vector.shape_cast %219 : vector<8x1xi1> to vector<8x1xi1>
      %221 = vector.broadcast %220 : vector<8x1xi1> to vector<8x128xi1>
      %222 = arith.select %221, %216, %186 : vector<8x128xi1>, vector<8x128xf32>
      %223 = vector.shape_cast %219 : vector<8x1xi1> to vector<8x1xi1>
      %224 = vector.broadcast %223 : vector<8x1xi1> to vector<8x128xi1>
      %225 = arith.select %224, %214, %189 : vector<8x128xi1>, vector<8x128xf32>
      %cst_56 = arith.constant 0.000000e+00 : f32
      %226 = vector.shape_cast %219 : vector<8x1xi1> to vector<8x1xi1>
      %227 = vector.broadcast %226 : vector<8x1xi1> to vector<8x128xi1>
      %228 = vector.broadcast %cst_56 : f32 to vector<8x128xf32>
      %229 = arith.select %227, %216, %228 : vector<8x128xi1>, vector<8x128xf32>
      %c5_57 = arith.constant 5 : index
      %c0_58 = arith.constant 0 : index
      %c0_59 = arith.constant 0 : index
      %230 = vector.load %arg6[%c5_57, %c0_58, %c0_59] : memref<8x8x128xf32, #tpu.memory_space<vmem>>, vector<1x8x128xf32>
      %231 = vector.shape_cast %230 : vector<1x8x128xf32> to vector<8x128xf32>
      %232 = vector.shape_cast %229 : vector<8x128xf32> to vector<1x8x128xf32>
      tpu.vector_store %arg6[%c5_57, %c0_58, %c0_59], %232 {strides = array<i32>} : memref<8x8x128xf32, #tpu.memory_space<vmem>>, vector<1x8x128xf32>,
      %c6 = arith.constant 6 : index
      %c0_60 = arith.constant 0 : index
      %c0_61 = arith.constant 0 : index
      %233 = vector.load %arg3[%c6, %c0_60, %c0_61] : memref<8x8x512xf32, #tpu.memory_space<vmem>>, vector<1x8x512xf32>
      %234 = vector.shape_cast %233 : vector<1x8x512xf32> to vector<8x512xf32>
      %cst_62 = arith.constant dense<0.000000e+00> : vector<8x512xf32>
      %235 = tpu.matmul %222, %14, %cst_62 {dimension_numbers = #tpu.dot_dimension_numbers<[1], [0], [0], [1], [0, 0, 1, 1], [], []>} : vector<8x128xf32>, vector<128x512xf32>, vector<8x512xf32> -> vector<8x512xf32>
      %236 = arith.addf %234, %235 : vector<8x512xf32>
      %237 = vector.extract_strided_slice %236 {offsets = [0, 0], sizes = [8, 384], strides = [1, 1]} : vector<8x512xf32> to vector<8x384xf32>
      %238 = arith.negf %237 : vector<8x384xf32>
      %239 = math.exp %238 : vector<8x384xf32>
      %cst_63 = arith.constant 1.000000e+00 : f32
      %240 = vector.broadcast %cst_63 : f32 to vector<8x384xf32>
      %241 = arith.addf %240, %239 : vector<8x384xf32>
      %242 = arith.divf %240, %241 : vector<8x384xf32>
      %243 = vector.extract_strided_slice %242 {offsets = [0, 0], sizes = [8, 128], strides = [1, 1]} : vector<8x384xf32> to vector<8x128xf32>
      %244 = vector.extract_strided_slice %242 {offsets = [0, 128], sizes = [8, 128], strides = [1, 1]} : vector<8x384xf32> to vector<8x128xf32>
      %245 = vector.extract_strided_slice %242 {offsets = [0, 256], sizes = [8, 128], strides = [1, 1]} : vector<8x384xf32> to vector<8x128xf32>
      %246 = vector.extract_strided_slice %236 {offsets = [0, 384], sizes = [8, 128], strides = [1, 1]} : vector<8x512xf32> to vector<8x128xf32>
      %247 = math.tanh %246 : vector<8x128xf32>
      %248 = arith.mulf %244, %225 : vector<8x128xf32>
      %249 = arith.mulf %243, %247 : vector<8x128xf32>
      %250 = arith.addf %248, %249 : vector<8x128xf32>
      %251 = math.tanh %250 : vector<8x128xf32>
      %252 = arith.mulf %245, %251 : vector<8x128xf32>
      %c6_i32 = arith.constant 6 : i32
      %253 = arith.addi %0, %c6_i32 : i32
      %254 = vector.broadcast %253 : i32 to vector<8x1xi32>
      %255 = arith.cmpi slt, %254, %13 : vector<8x1xi32>
      %256 = vector.shape_cast %255 : vector<8x1xi1> to vector<8x1xi1>
      %257 = vector.broadcast %256 : vector<8x1xi1> to vector<8x128xi1>
      %258 = arith.select %257, %252, %222 : vector<8x128xi1>, vector<8x128xf32>
      %259 = vector.shape_cast %255 : vector<8x1xi1> to vector<8x1xi1>
      %260 = vector.broadcast %259 : vector<8x1xi1> to vector<8x128xi1>
      %261 = arith.select %260, %250, %225 : vector<8x128xi1>, vector<8x128xf32>
      %cst_64 = arith.constant 0.000000e+00 : f32
      %262 = vector.shape_cast %255 : vector<8x1xi1> to vector<8x1xi1>
      %263 = vector.broadcast %262 : vector<8x1xi1> to vector<8x128xi1>
      %264 = vector.broadcast %cst_64 : f32 to vector<8x128xf32>
      %265 = arith.select %263, %252, %264 : vector<8x128xi1>, vector<8x128xf32>
      %c6_65 = arith.constant 6 : index
      %c0_66 = arith.constant 0 : index
      %c0_67 = arith.constant 0 : index
      %266 = vector.load %arg6[%c6_65, %c0_66, %c0_67] : memref<8x8x128xf32, #tpu.memory_space<vmem>>, vector<1x8x128xf32>
      %267 = vector.shape_cast %266 : vector<1x8x128xf32> to vector<8x128xf32>
      %268 = vector.shape_cast %265 : vector<8x128xf32> to vector<1x8x128xf32>
      tpu.vector_store %arg6[%c6_65, %c0_66, %c0_67], %268 {strides = array<i32>} : memref<8x8x128xf32, #tpu.memory_space<vmem>>, vector<1x8x128xf32>,
      %c7 = arith.constant 7 : index
      %c0_68 = arith.constant 0 : index
      %c0_69 = arith.constant 0 : index
      %269 = vector.load %arg3[%c7, %c0_68, %c0_69] : memref<8x8x512xf32, #tpu.memory_space<vmem>>, vector<1x8x512xf32>
      %270 = vector.shape_cast %269 : vector<1x8x512xf32> to vector<8x512xf32>
      %cst_70 = arith.constant dense<0.000000e+00> : vector<8x512xf32>
      %271 = tpu.matmul %258, %14, %cst_70 {dimension_numbers = #tpu.dot_dimension_numbers<[1], [0], [0], [1], [0, 0, 1, 1], [], []>} : vector<8x128xf32>, vector<128x512xf32>, vector<8x512xf32> -> vector<8x512xf32>
      %272 = arith.addf %270, %271 : vector<8x512xf32>
      %273 = vector.extract_strided_slice %272 {offsets = [0, 0], sizes = [8, 384], strides = [1, 1]} : vector<8x512xf32> to vector<8x384xf32>
      %274 = arith.negf %273 : vector<8x384xf32>
      %275 = math.exp %274 : vector<8x384xf32>
      %cst_71 = arith.constant 1.000000e+00 : f32
      %276 = vector.broadcast %cst_71 : f32 to vector<8x384xf32>
      %277 = arith.addf %276, %275 : vector<8x384xf32>
      %278 = arith.divf %276, %277 : vector<8x384xf32>
      %279 = vector.extract_strided_slice %278 {offsets = [0, 0], sizes = [8, 128], strides = [1, 1]} : vector<8x384xf32> to vector<8x128xf32>
      %280 = vector.extract_strided_slice %278 {offsets = [0, 128], sizes = [8, 128], strides = [1, 1]} : vector<8x384xf32> to vector<8x128xf32>
      %281 = vector.extract_strided_slice %278 {offsets = [0, 256], sizes = [8, 128], strides = [1, 1]} : vector<8x384xf32> to vector<8x128xf32>
      %282 = vector.extract_strided_slice %272 {offsets = [0, 384], sizes = [8, 128], strides = [1, 1]} : vector<8x512xf32> to vector<8x128xf32>
      %283 = math.tanh %282 : vector<8x128xf32>
      %284 = arith.mulf %280, %261 : vector<8x128xf32>
      %285 = arith.mulf %279, %283 : vector<8x128xf32>
      %286 = arith.addf %284, %285 : vector<8x128xf32>
      %287 = math.tanh %286 : vector<8x128xf32>
      %288 = arith.mulf %281, %287 : vector<8x128xf32>
      %c7_i32 = arith.constant 7 : i32
      %289 = arith.addi %0, %c7_i32 : i32
      %290 = vector.broadcast %289 : i32 to vector<8x1xi32>
      %291 = arith.cmpi slt, %290, %13 : vector<8x1xi32>
      %292 = vector.shape_cast %291 : vector<8x1xi1> to vector<8x1xi1>
      %293 = vector.broadcast %292 : vector<8x1xi1> to vector<8x128xi1>
      %294 = arith.select %293, %288, %258 : vector<8x128xi1>, vector<8x128xf32>
      %295 = vector.shape_cast %291 : vector<8x1xi1> to vector<8x1xi1>
      %296 = vector.broadcast %295 : vector<8x1xi1> to vector<8x128xi1>
      %297 = arith.select %296, %286, %261 : vector<8x128xi1>, vector<8x128xf32>
      %cst_72 = arith.constant 0.000000e+00 : f32
      %298 = vector.shape_cast %291 : vector<8x1xi1> to vector<8x1xi1>
      %299 = vector.broadcast %298 : vector<8x1xi1> to vector<8x128xi1>
      %300 = vector.broadcast %cst_72 : f32 to vector<8x128xf32>
      %301 = arith.select %299, %288, %300 : vector<8x128xi1>, vector<8x128xf32>
      %c7_73 = arith.constant 7 : index
      %c0_74 = arith.constant 0 : index
      %c0_75 = arith.constant 0 : index
      %302 = vector.load %arg6[%c7_73, %c0_74, %c0_75] : memref<8x8x128xf32, #tpu.memory_space<vmem>>, vector<1x8x128xf32>
      %303 = vector.shape_cast %302 : vector<1x8x128xf32> to vector<8x128xf32>
      %304 = vector.shape_cast %301 : vector<8x128xf32> to vector<1x8x128xf32>
      tpu.vector_store %arg6[%c7_73, %c0_74, %c0_75], %304 {strides = array<i32>} : memref<8x8x128xf32, #tpu.memory_space<vmem>>, vector<1x8x128xf32>,
      %c0_76 = arith.constant 0 : index
      %c0_77 = arith.constant 0 : index
      %305 = vector.load %arg7[%c0_76, %c0_77] : memref<8x128xf32, #tpu.memory_space<vmem>>, vector<8x128xf32>
      tpu.vector_store %arg7[%c0_76, %c0_77], %294 {strides = array<i32>} : memref<8x128xf32, #tpu.memory_space<vmem>>, vector<8x128xf32>,
      %c0_78 = arith.constant 0 : index
      %c0_79 = arith.constant 0 : index
      %306 = vector.load %arg8[%c0_78, %c0_79] : memref<8x128xf32, #tpu.memory_space<vmem>>, vector<8x128xf32>
      tpu.vector_store %arg8[%c0_78, %c0_79], %297 {strides = array<i32>} : memref<8x128xf32, #tpu.memory_space<vmem>>, vector<8x128xf32>,
    } else {
    }
    %true = arith.constant true
    %10 = arith.xori %7, %true : i1
    %11 = arith.extui %10 : i1 to i32
    %c0_i32_3 = arith.constant 0 : i32
    %12 = arith.cmpi ne, %11, %c0_i32_3 : i32
    scf.if %12 {
      %cst = arith.constant 0.000000e+00 : f32
      %13 = vector.broadcast %cst : f32 to vector<8x8x128xf32>
      %c0 = arith.constant 0 : index
      %c0_4 = arith.constant 0 : index
      %c0_5 = arith.constant 0 : index
      %14 = vector.load %arg6[%c0, %c0_4, %c0_5] : memref<8x8x128xf32, #tpu.memory_space<vmem>>, vector<8x8x128xf32>
      tpu.vector_store %arg6[%c0, %c0_4, %c0_5], %13 {strides = array<i32>} : memref<8x8x128xf32, #tpu.memory_space<vmem>>, vector<8x8x128xf32>,
    } else {
    }
    return
  }
  func.func @transform_0(%arg0: i32, %arg1: i32, %arg2: memref<8xi32, #tpu.memory_space<smem>>) -> (i32, i32, i32) {
    %c0_i32 = arith.constant 0 : i32
    %c0_i32_0 = arith.constant 0 : i32
    return %arg1, %arg0, %c0_i32 : i32, i32, i32
  }
  func.func @transform_1(%arg0: i32, %arg1: i32, %arg2: memref<8xi32, #tpu.memory_space<smem>>) -> (i32, i32) {
    %c0_i32 = arith.constant 0 : i32
    %c0_i32_0 = arith.constant 0 : i32
    return %arg0, %c0_i32 : i32, i32
  }
  func.func @transform_2(%arg0: i32, %arg1: i32, %arg2: memref<8xi32, #tpu.memory_space<smem>>) -> (i32, i32) {
    %c0_i32 = arith.constant 0 : i32
    %c0_i32_0 = arith.constant 0 : i32
    %c0_i32_1 = arith.constant 0 : i32
    return %c0_i32, %c0_i32_0 : i32, i32
  }
  func.func @transform_3(%arg0: i32, %arg1: i32, %arg2: memref<8xi32, #tpu.memory_space<smem>>) -> (i32, i32, i32) {
    %c0_i32 = arith.constant 0 : i32
    %c0_i32_0 = arith.constant 0 : i32
    return %arg1, %arg0, %c0_i32 : i32, i32, i32
  }
  func.func @transform_4(%arg0: i32, %arg1: i32, %arg2: memref<8xi32, #tpu.memory_space<smem>>) -> (i32, i32) {
    %c0_i32 = arith.constant 0 : i32
    %c0_i32_0 = arith.constant 0 : i32
    return %arg0, %c0_i32 : i32, i32
  }
  func.func @transform_5(%arg0: i32, %arg1: i32, %arg2: memref<8xi32, #tpu.memory_space<smem>>) -> (i32, i32) {
    %c0_i32 = arith.constant 0 : i32
    %c0_i32_0 = arith.constant 0 : i32
    return %arg0, %c0_i32 : i32, i32
  }
}

</mosaic_0001>

<llo_original>
// kernel: tpu_custom_call.1
$region0: #{tpu_custom_call.1}
  #allocation0 [shape = 'u32[]', space=smem, size = 0x4, offset = 0x4, fixed_abs, tag = 'smem constant byte address 0x4 - core index']
  #allocation1 [shape = 'u32[144,128]{1,0:T(1,128)}', space=vmem, size = 0x12000, scoped, tag = 'internal scratch']
  #allocation2 [shape = 's32[1]{0}', space=sflag, size = 0x4, scoped, tag = 'scoped memory for tpu_custom_call.1']
  #allocation3 [shape = 'u8[512]{0}', space=smem, size = 0x200, scoped, tag = 'prefetched SMEM operand 0']
  %s0 = inlined_call_operand.vmem [shape: s32[8], index: 0, kind: input, shape index: {}]
  %s1 = inlined_call_operand.hbm [shape: f32[8,8,512], index: 1, kind: input, shape index: {}]
  %s2 = inlined_call_operand.vmem [shape: s32[8,1], index: 2, kind: input, shape index: {}]
  %s3 = inlined_call_operand.hbm [shape: f32[128,512], index: 3, kind: input, shape index: {}]
  %s4 = inlined_call_operand.hbm [shape: f32[8,8,128], index: 4, kind: output, shape index: {0}]
  %s5 = inlined_call_operand.hbm [shape: f32[8,128], index: 5, kind: output, shape index: {1}]
  %s6 = inlined_call_operand.hbm [shape: f32[8,128], index: 6, kind: output, shape index: {2}]
  %7 = xla_tuple %s4, %s5, %s6
  %s8 = sld [smem:[#allocation0]]
  $region58: #{tpu_custom_call.1} parent=0
    _
  %s10 = ssub.s32 1, %s8
  %s11 = scalar_select 0, %s10, %s8
  %s12 = sshll.u32 %s0, 4
  %s13 = int_to_ptr.vmem [resolvable:$true] %s12
  %15 = dma.vmem_to_smem %s13, 16, [#allocation3], [#allocation2]
  %16 = dma.done [#allocation2], 16
  %17 = sfence
  $region1: #{tpu_custom_call.1} parent=0
    #allocation4 [shape = 'u8[131072]{0}', space=vmem, size = 0x20000, scoped, tag = 'input window, operand 1, single buffered']
    #allocation5 [shape = 's32[1]{0}', space=sflag, size = 0x4, scoped, tag = 'scoped memory for tpu_custom_call.1']
    #allocation6 [shape = 's32[1]{0}', space=sflag, size = 0x4, scoped, tag = 'scoped memory for tpu_custom_call.1']
    #allocation7 [shape = 'u8[262144]{0}', space=vmem, size = 0x40000, scoped, tag = 'input window, operand 3, single buffered']
    #allocation8 [shape = 's32[1]{0}', space=sflag, size = 0x4, scoped, tag = 'scoped memory for tpu_custom_call.1']
    #allocation9 [shape = 'u8[32768]{0}', space=vmem, size = 0x8000, scoped, tag = 'output window, operand 0, single buffered']
    #allocation10 [shape = 'u8[4096]{0}', space=vmem, size = 0x1000, scoped, tag = 'output window, operand 1, single buffered']
    #allocation11 [shape = 's32[1]{0}', space=sflag, size = 0x4, scoped, tag = 'scoped memory for tpu_custom_call.1']
    #allocation12 [shape = 'u8[4096]{0}', space=vmem, size = 0x1000, scoped, tag = 'output window, operand 2, single buffered']
    %18 = vsyncpa [#allocation5], 0
    %19 = vsyncpa [#allocation8], 0
    %20 = vsyncpa [#allocation6], 0
    %21 = vsyncpa [#allocation11], 0
    // Predicated region
    $region2: #{tpu_custom_call.1} parent=1 // pred_check
      _
    $region3: #{tpu_custom_call.1} parent=1 // pred_check_branch
      %23 = sbr.rel (0) target = $region5
    $region4: #{tpu_custom_call.1} parent=1 // pred_region
      %s25 = ssub.s32 4096, 4096
      %26 = vsyncadd [#allocation5], %s25
      %s27 = sshll.u32 [#allocation4], 4
      %s28 = int_to_ptr.vmem [resolvable:$true] %s27
      %33 = dma.hbm_to_vmem [thread:$0]  %s1, 4096, %s28, [#allocation5], 512, 512, 32
    $region5: #{tpu_custom_call.1} parent=1 // pred_fallthru
      _
    // Predicated region
    $region6: #{tpu_custom_call.1} parent=1 // pred_check
      _
    $region7: #{tpu_custom_call.1} parent=1 // pred_check_branch
      %35 = sbr.rel (0) target = $region9
    $region8: #{tpu_custom_call.1} parent=1 // pred_region
      _
    $region9: #{tpu_custom_call.1} parent=1 // pred_fallthru
      _
    // Predicated region
    $region10: #{tpu_custom_call.1} parent=1 // pred_check
      _
    $region11: #{tpu_custom_call.1} parent=1 // pred_check_branch
      %37 = sbr.rel (0) target = $region13
    $region12: #{tpu_custom_call.1} parent=1 // pred_region
      %s39 = ssub.s32 8192, 8192
      %40 = vsyncadd [#allocation8], %s39
      %s41 = sshll.u32 [#allocation7], 4
      %s42 = int_to_ptr.vmem [resolvable:$true] %s41
      %47 = dma.hbm_to_vmem [thread:$0]  %s3, 8192, %s42, [#allocation8], 512, 512, 32
    $region13: #{tpu_custom_call.1} parent=1 // pred_fallthru
      _
    // Predicated region
    $region14: #{tpu_custom_call.1} parent=1 // pred_check
      _
    $region15: #{tpu_custom_call.1} parent=1 // pred_check_branch
      %49 = sbr.rel (0) target = $region17
    $region16: #{tpu_custom_call.1} parent=1 // pred_region
      %50 = dma.done [#allocation5], 4096
    $region17: #{tpu_custom_call.1} parent=1 // pred_fallthru
      _
    // Predicated region
    $region18: #{tpu_custom_call.1} parent=1 // pred_check
      _
    $region19: #{tpu_custom_call.1} parent=1 // pred_check_branch
      %52 = sbr.rel (0) target = $region21
    $region20: #{tpu_custom_call.1} parent=1 // pred_region
      %53 = dma.done [#allocation8], 8192
    $region21: #{tpu_custom_call.1} parent=1 // pred_fallthru
      _
    %s54 = smul.u32 0, 8
    %p55 = scmp.eq.s32.totalorder 0, 0
    // Predicated region
    $region22: #{tpu_custom_call.1} parent=1 // pred_check
      %p56 = pneg %p55
    $region23: #{tpu_custom_call.1} parent=1 // pred_check_branch
      %58 = sbr.rel (%p56) target = $region25
    $region24: #{tpu_custom_call.1} parent=1 // pred_region
      %59 = vst [vmem:[#allocation10] sm:$0xff] 0.0
      %60 = vst [vmem:[#allocation12] sm:$0xff] 0.0
    $region25: #{tpu_custom_call.1} parent=1 // pred_fallthru
      _
    %s61 = smul.u32 0, 8
    %s62 = sld [smem:[#allocation3 + %s61]]
    %p63 = scmp.lt.s32.totalorder %s54, %s62
    // Predicated region
    $region26: #{tpu_custom_call.1} parent=1 // pred_check
      %p64 = pneg %p63
    $region27: #{tpu_custom_call.1} parent=1 // pred_check_branch
      %66 = sbr.rel (%p64) target = $region29
    $region28: #{tpu_custom_call.1} parent=1 // pred_region
      %v67 = vld [vmem:[%s2] sm:$0xff]
      %v68 = vld [vmem:[#allocation7] sm:$0xff]
      %v69 = vld [vmem:[#allocation7 + $0x8] sm:$0xff]
      %v70 = vld [vmem:[#allocation7 + $0x10] sm:$0xff]
      %v71 = vld [vmem:[#allocation7 + $0x18] sm:$0xff]
      %v72 = vld [vmem:[#allocation7 + $0x20] sm:$0xff]
      %v73 = vld [vmem:[#allocation7 + $0x28] sm:$0xff]
      %v74 = vld [vmem:[#allocation7 + $0x30] sm:$0xff]
      %v75 = vld [vmem:[#allocation7 + $0x38] sm:$0xff]
      %v76 = vld [vmem:[#allocation7 + $0x40] sm:$0xff]
      %v77 = vld [vmem:[#allocation7 + $0x48] sm:$0xff]
      %v78 = vld [vmem:[#allocation7 + $0x50] sm:$0xff]
      %v79 = vld [vmem:[#allocation7 + $0x58] sm:$0xff]
      %v80 = vld [vmem:[#allocation7 + $0x60] sm:$0xff]
      %v81 = vld [vmem:[#allocation7 + $0x68] sm:$0xff]
      %v82 = vld [vmem:[#allocation7 + $0x70] sm:$0xff]
      %v83 = vld [vmem:[#allocation7 + $0x78] sm:$0xff]
      %v84 = vld [vmem:[#allocation7 + $0x80] sm:$0xff]
      %v85 = vld [vmem:[#allocation7 + $0x88] sm:$0xff]
      %v86 = vld [vmem:[#allocation7 + $0x90] sm:$0xff]
      %v87 = vld [vmem:[#allocation7 + $0x98] sm:$0xff]
      %v88 = vld [vmem:[#allocation7 + $0xa0] sm:$0xff]
      %v89 = vld [vmem:[#allocation7 + $0xa8] sm:$0xff]
      %v90 = vld [vmem:[#allocation7 + $0xb0] sm:$0xff]
      %v91 = vld [vmem:[#allocation7 + $0xb8] sm:$0xff]
      %v92 = vld [vmem:[#allocation7 + $0xc0] sm:$0xff]
      %v93 = vld [vmem:[#allocation7 + $0xc8] sm:$0xff]
      %v94 = vld [vmem:[#allocation7 + $0xd0] sm:$0xff]
      %v95 = vld [vmem:[#allocation7 + $0xd8] sm:$0xff]
      %v96 = vld [vmem:[#allocation7 + $0xe0] sm:$0xff]
      %v97 = vld [vmem:[#allocation7 + $0xe8] sm:$0xff]
      %v98 = vld [vmem:[#allocation7 + $0xf0] sm:$0xff]
      %v99 = vld [vmem:[#allocation7 + $0xf8] sm:$0xff]
      %v100 = vld [vmem:[#allocation7 + $0x100] sm:$0xff]
      %v101 = vld [vmem:[#allocation7 + $0x108] sm:$0xff]
      %v102 = vld [vmem:[#allocation7 + $0x110] sm:$0xff]
      %v103 = vld [vmem:[#allocation7 + $0x118] sm:$0xff]
      %v104 = vld [vmem:[#allocation7 + $0x120] sm:$0xff]
      %v105 = vld [vmem:[#allocation7 + $0x128] sm:$0xff]
      %v106 = vld [vmem:[#allocation7 + $0x130] sm:$0xff]
      %v107 = vld [vmem:[#allocation7 + $0x138] sm:$0xff]
      %v108 = vld [vmem:[#allocation7 + $0x140] sm:$0xff]
      %v109 = vld [vmem:[#allocation7 + $0x148] sm:$0xff]
      %v110 = vld [vmem:[#allocation7 + $0x150] sm:$0xff]
      %v111 = vld [vmem:[#allocation7 + $0x158] sm:$0xff]
      %v112 = vld [vmem:[#allocation7 + $0x160] sm:$0xff]
      %v113 = vld [vmem:[#allocation7 + $0x168] sm:$0xff]
      %v114 = vld [vmem:[#allocation7 + $0x170] sm:$0xff]
      %v115 = vld [vmem:[#allocation7 + $0x178] sm:$0xff]
      %v116 = vld [vmem:[#allocation7 + $0x180] sm:$0xff]
      %v117 = vld [vmem:[#allocation7 + $0x188] sm:$0xff]
      %v118 = vld [vmem:[#allocation7 + $0x190] sm:$0xff]
      %v119 = vld [vmem:[#allocation7 + $0x198] sm:$0xff]
      %v120 = vld [vmem:[#allocation7 + $0x1a0] sm:$0xff]
      %v121 = vld [vmem:[#allocation7 + $0x1a8] sm:$0xff]
      %v122 = vld [vmem:[#allocation7 + $0x1b0] sm:$0xff]
      %v123 = vld [vmem:[#allocation7 + $0x1b8] sm:$0xff]
      %v124 = vld [vmem:[#allocation7 + $0x1c0] sm:$0xff]
      %v125 = vld [vmem:[#allocation7 + $0x1c8] sm:$0xff]
      %v126 = vld [vmem:[#allocation7 + $0x1d0] sm:$0xff]
      %v127 = vld [vmem:[#allocation7 + $0x1d8] sm:$0xff]
      %v128 = vld [vmem:[#allocation7 + $0x1e0] sm:$0xff]
      %v129 = vld [vmem:[#allocation7 + $0x1e8] sm:$0xff]
      %v130 = vld [vmem:[#allocation7 + $0x1f0] sm:$0xff]
      %v131 = vld [vmem:[#allocation7 + $0x1f8] sm:$0xff]
      %v132 = vld [vmem:[#allocation10] sm:$0xff]
      %v133 = vld [vmem:[#allocation12] sm:$0xff]
      %v134 = vld [vmem:[#allocation4] sm:$0xff]
      %v135 = vld [vmem:[#allocation4 + $0x8] sm:$0xff]
      %v136 = vld [vmem:[#allocation4 + $0x10] sm:$0xff]
      %v137 = vld [vmem:[#allocation4 + $0x18] sm:$0xff]
      %138 = vmatprep.subr.mxu0 %v69
      %139 = vmatpush1.msra.mxu0 %v68
      %140 = vmatprep.subr.mxu0 %v73
      %141 = vmatpush1.msra.mxu0 %v72
      %142 = vmatprep.subr.mxu0 %v77
      %143 = vmatpush1.msra.mxu0 %v76
      %144 = vmatprep.subr.mxu0 %v81
      %145 = vmatpush1.msra.mxu0 %v80
      %146 = vmatprep.subr.mxu0 %v85
      %147 = vmatpush1.msra.mxu0 %v84
      %148 = vmatprep.subr.mxu0 %v89
      %149 = vmatpush1.msra.mxu0 %v88
      %150 = vmatprep.subr.mxu0 %v93
      %151 = vmatpush1.msra.mxu0 %v92
      %152 = vmatprep.subr.mxu0 %v97
      %153 = vmatpush1.msra.mxu0 %v96
      %154 = vmatprep.subr.mxu0 %v101
      %155 = vmatpush1.msra.mxu0 %v100
      %156 = vmatprep.subr.mxu0 %v105
      %157 = vmatpush1.msra.mxu0 %v104
      %158 = vmatprep.subr.mxu0 %v109
      %159 = vmatpush1.msra.mxu0 %v108
      %160 = vmatprep.subr.mxu0 %v113
      %161 = vmatpush1.msra.mxu0 %v112
      %162 = vmatprep.subr.mxu0 %v117
      %163 = vmatpush1.msra.mxu0 %v116
      %164 = vmatprep.subr.mxu0 %v121
      %165 = vmatpush1.msra.mxu0 %v120
      %166 = vmatprep.subr.mxu0 %v125
      %167 = vmatpush1.msra.mxu0 %v124
      %168 = vmatprep.subr.mxu0 %v129
      %169 = vmatpush1.msra.mxu0 %v128
      %170 = vmatprep.subr.mxu0 0.0
      %171 = vmatpush1.msra.mxu0 0.0
      %172 = vmatprep.subr.mxu0 0.0
      %173 = vmatpush1.msra.mxu0 0.0
      %174 = vmatprep.subr.mxu0 0.0
      %175 = vmatpush1.msra.mxu0 0.0
      %176 = vmatprep.subr.mxu0 0.0
      %177 = vmatpush1.msra.mxu0 0.0
      %178 = vmatprep.subr.mxu0 0.0
      %179 = vmatpush1.msra.mxu0 0.0
      %180 = vmatprep.subr.mxu0 0.0
      %181 = vmatpush1.msra.mxu0 0.0
      %182 = vmatprep.subr.mxu0 0.0
      %183 = vmatpush1.msra.mxu0 0.0
      %184 = vmatprep.subr.mxu0 0.0
      %185 = vmatpush1.msra.mxu0 0.0
      %186 = vmatprep.subr.mxu0 0.0
      %187 = vmatpush1.msra.mxu0 0.0
      %188 = vmatprep.subr.mxu0 0.0
      %189 = vmatpush1.msra.mxu0 0.0
      %190 = vmatprep.subr.mxu0 0.0
      %191 = vmatpush1.msra.mxu0 0.0
      %192 = vmatprep.subr.mxu0 0.0
      %193 = vmatpush1.msra.mxu0 0.0
      %194 = vmatprep.subr.mxu0 0.0
      %195 = vmatpush1.msra.mxu0 0.0
      %196 = vmatprep.subr.mxu0 0.0
      %197 = vmatpush1.msra.mxu0 0.0
      %198 = vmatprep.subr.mxu0 0.0
      %199 = vmatpush1.msra.mxu0 0.0
      %200 = vmatprep.subr.mxu0 0.0
      %201 = vmatpush1.msra.mxu0 0.0
      %202 = vmatprep.mubr.f32.mxu0 0.0
      %203 = vmatmul.mubr.f32.gmra.mrb[0].mxu0 %v132
      %v204 = vpop.f32.mrb[0].mxu0
      %v205 = vadd.f32 0.0, %v204
      %v206 = vpop.f32.mrb[0].mxu0
      %v207 = vadd.f32 0.0, %v206
      %208 = vdwg.mxu0
      %209 = vmatprep.subr.mxu0 %v71
      %210 = vmatpush1.msra.mxu0 %v70
      %211 = vmatprep.subr.mxu0 %v75
      %212 = vmatpush1.msra.mxu0 %v74
      %213 = vmatprep.subr.mxu0 %v79
      %214 = vmatpush1.msra.mxu0 %v78
      %215 = vmatprep.subr.mxu0 %v83
      %216 = vmatpush1.msra.mxu0 %v82
      %217 = vmatprep.subr.mxu0 %v87
      %218 = vmatpush1.msra.mxu0 %v86
      %219 = vmatprep.subr.mxu0 %v91
      %220 = vmatpush1.msra.mxu0 %v90
      %221 = vmatprep.subr.mxu0 %v95
      %222 = vmatpush1.msra.mxu0 %v94
      %223 = vmatprep.subr.mxu0 %v99
      %224 = vmatpush1.msra.mxu0 %v98
      %225 = vmatprep.subr.mxu0 %v103
      %226 = vmatpush1.msra.mxu0 %v102
      %227 = vmatprep.subr.mxu0 %v107
      %228 = vmatpush1.msra.mxu0 %v106
      %229 = vmatprep.subr.mxu0 %v111
      %230 = vmatpush1.msra.mxu0 %v110
      %231 = vmatprep.subr.mxu0 %v115
      %232 = vmatpush1.msra.mxu0 %v114
      %233 = vmatprep.subr.mxu0 %v119
      %234 = vmatpush1.msra.mxu0 %v118
      %235 = vmatprep.subr.mxu0 %v123
      %236 = vmatpush1.msra.mxu0 %v122
      %237 = vmatprep.subr.mxu0 %v127
      %238 = vmatpush1.msra.mxu0 %v126
      %239 = vmatprep.subr.mxu0 %v131
      %240 = vmatpush1.msra.mxu0 %v130
      %241 = vmatprep.subr.mxu0 0.0
      %242 = vmatpush1.msra.mxu0 0.0
      %243 = vmatprep.subr.mxu0 0.0
      %244 = vmatpush1.msra.mxu0 0.0
      %245 = vmatprep.subr.mxu0 0.0
      %246 = vmatpush1.msra.mxu0 0.0
      %247 = vmatprep.subr.mxu0 0.0
      %248 = vmatpush1.msra.mxu0 0.0
      %249 = vmatprep.subr.mxu0 0.0
      %250 = vmatpush1.msra.mxu0 0.0
      %251 = vmatprep.subr.mxu0 0.0
      %252 = vmatpush1.msra.mxu0 0.0
      %253 = vmatprep.subr.mxu0 0.0
      %254 = vmatpush1.msra.mxu0 0.0
      %255 = vmatprep.subr.mxu0 0.0
      %256 = vmatpush1.msra.mxu0 0.0
      %257 = vmatprep.subr.mxu0 0.0
      %258 = vmatpush1.msra.mxu0 0.0
      %259 = vmatprep.subr.mxu0 0.0
      %260 = vmatpush1.msra.mxu0 0.0
      %261 = vmatprep.subr.mxu0 0.0
      %262 = vmatpush1.msra.mxu0 0.0
      %263 = vmatprep.subr.mxu0 0.0
      %264 = vmatpush1.msra.mxu0 0.0
      %265 = vmatprep.subr.mxu0 0.0
      %266 = vmatpush1.msra.mxu0 0.0
      %267 = vmatprep.subr.mxu0 0.0
      %268 = vmatpush1.msra.mxu0 0.0
      %269 = vmatprep.subr.mxu0 0.0
      %270 = vmatpush1.msra.mxu0 0.0
      %271 = vmatprep.subr.mxu0 0.0
      %272 = vmatpush1.msra.mxu0 0.0
      %273 = vmatprep.mubr.f32.mxu0 0.0
      %274 = vmatmul.mubr.f32.gmra.mrb[0].mxu0 %v132
      %v275 = vpop.f32.mrb[0].mxu0
      %v276 = vadd.f32 0.0, %v275
      %v277 = vpop.f32.mrb[0].mxu0
      %v278 = vadd.f32 0.0, %v277
      %279 = vdwg.mxu0
      %v280 = vadd.f32 %v134, %v205
      %v281 = vadd.f32 %v135, %v207
      %v282 = vadd.f32 %v136, %v276
      %v283 = vadd.f32 %v137, %v278
      %v284 = vxor.u32 %v280, 2147483648
      %v285 = vxor.u32 %v281, 2147483648
      %v286 = vxor.u32 %v282, 2147483648
      %v287 = vmul.f32 %v284, 1.442695
      %v288 = vpow.pop %v287
      %v289 = vmul.f32 %v285, 1.442695
      %v290 = vpow.pop %v289
      %v291 = vmul.f32 %v286, 1.442695
      %v292 = vpow.pop %v291
      %v293 = vadd.f32 %v288, 1.0
      %v294 = vadd.f32 %v290, 1.0
      %v295 = vadd.f32 %v292, 1.0
      %v296 = vrcp.pop %v293
      %v297 = vmul.f32 1.0, %v296
      %v298 = vrcp.pop %v294
      %v299 = vmul.f32 1.0, %v298
      %v300 = vrcp.pop %v295
      %v301 = vmul.f32 1.0, %v300
      %v302 = vtanh.pop %v283
      %v303 = vmul.f32 %v299, %v133
      %v304 = vmul.f32 %v297, %v302
      %v305 = vadd.f32 %v303, %v304
      %v306 = vtanh.pop %v305
      %v307 = vmul.f32 %v301, %v306
      %v308 = vstv %s54
      %vm309 = vcmp.lt.s32.totalorder %v308, %v67
      %v310 = vsel %vm309, 1, 0
      %311 = vset.pattern.permute.xlu0 0
      %312 = vperm.xlu0 %311, %v310
      %v313 = vpop.permute.xlu0 %312
      %vm314 = vcmp.eq.s32.totalorder %v313, 1
      %v315 = vsel %vm314, %v307, %v132
      %v316 = vsel %vm314, %v305, %v133
      %v317 = vsel %vm314, %v307, 0.0
      %318 = vst [vmem:[#allocation9] sm:$0xff] %v317
      %s319 = scalar_lea.vmem [#allocation4], 32
      %v320 = vld [vmem:[%s319] sm:$0xff]
      %v321 = vld [vmem:[%s319 + $0x8] sm:$0xff]
      %v322 = vld [vmem:[%s319 + $0x10] sm:$0xff]
      %v323 = vld [vmem:[%s319 + $0x18] sm:$0xff]
      %324 = vmatprep.subr.mxu0 %v69
      %325 = vmatpush1.msra.mxu0 %v68
      %326 = vmatprep.subr.mxu0 %v73
      %327 = vmatpush1.msra.mxu0 %v72
      %328 = vmatprep.subr.mxu0 %v77
      %329 = vmatpush1.msra.mxu0 %v76
      %330 = vmatprep.subr.mxu0 %v81
      %331 = vmatpush1.msra.mxu0 %v80
      %332 = vmatprep.subr.mxu0 %v85
      %333 = vmatpush1.msra.mxu0 %v84
      %334 = vmatprep.subr.mxu0 %v89
      %335 = vmatpush1.msra.mxu0 %v88
      %336 = vmatprep.subr.mxu0 %v93
      %337 = vmatpush1.msra.mxu0 %v92
      %338 = vmatprep.subr.mxu0 %v97
      %339 = vmatpush1.msra.mxu0 %v96
      %340 = vmatprep.subr.mxu0 %v101
      %341 = vmatpush1.msra.mxu0 %v100
      %342 = vmatprep.subr.mxu0 %v105
      %343 = vmatpush1.msra.mxu0 %v104
      %344 = vmatprep.subr.mxu0 %v109
      %345 = vmatpush1.msra.mxu0 %v108
      %346 = vmatprep.subr.mxu0 %v113
      %347 = vmatpush1.msra.mxu0 %v112
      %348 = vmatprep.subr.mxu0 %v117
      %349 = vmatpush1.msra.mxu0 %v116
      %350 = vmatprep.subr.mxu0 %v121
      %351 = vmatpush1.msra.mxu0 %v120
      %352 = vmatprep.subr.mxu0 %v125
      %353 = vmatpush1.msra.mxu0 %v124
      %354 = vmatprep.subr.mxu0 %v129
      %355 = vmatpush1.msra.mxu0 %v128
      %356 = vmatprep.subr.mxu0 0.0
      %357 = vmatpush1.msra.mxu0 0.0
      %358 = vmatprep.subr.mxu0 0.0
      %359 = vmatpush1.msra.mxu0 0.0
      %360 = vmatprep.subr.mxu0 0.0
      %361 = vmatpush1.msra.mxu0 0.0
      %362 = vmatprep.subr.mxu0 0.0
      %363 = vmatpush1.msra.mxu0 0.0
      %364 = vmatprep.subr.mxu0 0.0
      %365 = vmatpush1.msra.mxu0 0.0
      %366 = vmatprep.subr.mxu0 0.0
      %367 = vmatpush1.msra.mxu0 0.0
      %368 = vmatprep.subr.mxu0 0.0
      %369 = vmatpush1.msra.mxu0 0.0
      %370 = vmatprep.subr.mxu0 0.0
      %371 = vmatpush1.msra.mxu0 0.0
      %372 = vmatprep.subr.mxu0 0.0
      %373 = vmatpush1.msra.mxu0 0.0
      %374 = vmatprep.subr.mxu0 0.0
      %375 = vmatpush1.msra.mxu0 0.0
      %376 = vmatprep.subr.mxu0 0.0
      %377 = vmatpush1.msra.mxu0 0.0
      %378 = vmatprep.subr.mxu0 0.0
      %379 = vmatpush1.msra.mxu0 0.0
      %380 = vmatprep.subr.mxu0 0.0
      %381 = vmatpush1.msra.mxu0 0.0
      %382 = vmatprep.subr.mxu0 0.0
      %383 = vmatpush1.msra.mxu0 0.0
      %384 = vmatprep.subr.mxu0 0.0
      %385 = vmatpush1.msra.mxu0 0.0
      %386 = vmatprep.subr.mxu0 0.0
      %387 = vmatpush1.msra.mxu0 0.0
      %388 = vmatprep.mubr.f32.mxu0 0.0
      %389 = vmatmul.mubr.f32.gmra.mrb[0].mxu0 %v315
      %v390 = vpop.f32.mrb[0].mxu0
      %v391 = vadd.f32 0.0, %v390
      %v392 = vpop.f32.mrb[0].mxu0
      %v393 = vadd.f32 0.0, %v392
      %394 = vdwg.mxu0
      %395 = vmatprep.subr.mxu0 %v71
      %396 = vmatpush1.msra.mxu0 %v70
      %397 = vmatprep.subr.mxu0 %v75
      %398 = vmatpush1.msra.mxu0 %v74
      %399 = vmatprep.subr.mxu0 %v79
      %400 = vmatpush1.msra.mxu0 %v78
      %401 = vmatprep.subr.mxu0 %v83
      %402 = vmatpush1.msra.mxu0 %v82
      %403 = vmatprep.subr.mxu0 %v87
      %404 = vmatpush1.msra.mxu0 %v86
      %405 = vmatprep.subr.mxu0 %v91
      %406 = vmatpush1.msra.mxu0 %v90
      %407 = vmatprep.subr.mxu0 %v95
      %408 = vmatpush1.msra.mxu0 %v94
      %409 = vmatprep.subr.mxu0 %v99
      %410 = vmatpush1.msra.mxu0 %v98
      %411 = vmatprep.subr.mxu0 %v103
      %412 = vmatpush1.msra.mxu0 %v102
      %413 = vmatprep.subr.mxu0 %v107
      %414 = vmatpush1.msra.mxu0 %v106
      %415 = vmatprep.subr.mxu0 %v111
      %416 = vmatpush1.msra.mxu0 %v110
      %417 = vmatprep.subr.mxu0 %v115
      %418 = vmatpush1.msra.mxu0 %v114
      %419 = vmatprep.subr.mxu0 %v119
      %420 = vmatpush1.msra.mxu0 %v118
      %421 = vmatprep.subr.mxu0 %v123
      %422 = vmatpush1.msra.mxu0 %v122
      %423 = vmatprep.subr.mxu0 %v127
      %424 = vmatpush1.msra.mxu0 %v126
      %425 = vmatprep.subr.mxu0 %v131
      %426 = vmatpush1.msra.mxu0 %v130
      %427 = vmatprep.subr.mxu0 0.0
      %428 = vmatpush1.msra.mxu0 0.0
      %429 = vmatprep.subr.mxu0 0.0
      %430 = vmatpush1.msra.mxu0 0.0
      %431 = vmatprep.subr.mxu0 0.0
      %432 = vmatpush1.msra.mxu0 0.0
      %433 = vmatprep.subr.mxu0 0.0
      %434 = vmatpush1.msra.mxu0 0.0
      %435 = vmatprep.subr.mxu0 0.0
      %436 = vmatpush1.msra.mxu0 0.0
      %437 = vmatprep.subr.mxu0 0.0
      %438 = vmatpush1.msra.mxu0 0.0
      %439 = vmatprep.subr.mxu0 0.0
      %440 = vmatpush1.msra.mxu0 0.0
      %441 = vmatprep.subr.mxu0 0.0
      %442 = vmatpush1.msra.mxu0 0.0
      %443 = vmatprep.subr.mxu0 0.0
      %444 = vmatpush1.msra.mxu0 0.0
      %445 = vmatprep.subr.mxu0 0.0
      %446 = vmatpush1.msra.mxu0 0.0
      %447 = vmatprep.subr.mxu0 0.0
      %448 = vmatpush1.msra.mxu0 0.0
      %449 = vmatprep.subr.mxu0 0.0
      %450 = vmatpush1.msra.mxu0 0.0
      %451 = vmatprep.subr.mxu0 0.0
      %452 = vmatpush1.msra.mxu0 0.0
      %453 = vmatprep.subr.mxu0 0.0
      %454 = vmatpush1.msra.mxu0 0.0
      %455 = vmatprep.subr.mxu0 0.0
      %456 = vmatpush1.msra.mxu0 0.0
      %457 = vmatprep.subr.mxu0 0.0
      %458 = vmatpush1.msra.mxu0 0.0
      %459 = vmatprep.mubr.f32.mxu0 0.0
      %460 = vmatmul.mubr.f32.gmra.mrb[0].mxu0 %v315
      %v461 = vpop.f32.mrb[0].mxu0
      %v462 = vadd.f32 0.0, %v461
      %v463 = vpop.f32.mrb[0].mxu0
      %v464 = vadd.f32 0.0, %v463
      %465 = vdwg.mxu0
      %v466 = vadd.f32 %v320, %v391
      %v467 = vadd.f32 %v321, %v393
      %v468 = vadd.f32 %v322, %v462
      %v469 = vadd.f32 %v323, %v464
      %v470 = vxor.u32 %v466, 2147483648
      %v471 = vxor.u32 %v467, 2147483648
      %v472 = vxor.u32 %v468, 2147483648
      %v473 = vmul.f32 %v470, 1.442695
      %v474 = vpow.pop %v473
      %v475 = vmul.f32 %v471, 1.442695
      %v476 = vpow.pop %v475
      %v477 = vmul.f32 %v472, 1.442695
      %v478 = vpow.pop %v477
      %v479 = vadd.f32 %v474, 1.0
      %v480 = vadd.f32 %v476, 1.0
      %v481 = vadd.f32 %v478, 1.0
      %v482 = vrcp.pop %v479
      %v483 = vmul.f32 1.0, %v482
      %v484 = vrcp.pop %v480
      %v485 = vmul.f32 1.0, %v484
      %v486 = vrcp.pop %v481
      %v487 = vmul.f32 1.0, %v486
      %v488 = vtanh.pop %v469
      %v489 = vmul.f32 %v485, %v316
      %v490 = vmul.f32 %v483, %v488
      %v491 = vadd.f32 %v489, %v490
      %v492 = vtanh.pop %v491
      %v493 = vmul.f32 %v487, %v492
      %s494 = sadd.s32 %s54, 1
      %v495 = vstv %s494
      %vm496 = vcmp.lt.s32.totalorder %v495, %v67
      %v497 = vsel %vm496, 1, 0
      %498 = vset.pattern.permute.xlu0 0
      %499 = vperm.xlu0 %498, %v497
      %v500 = vpop.permute.xlu0 %499
      %vm501 = vcmp.eq.s32.totalorder %v500, 1
      %v502 = vsel %vm501, %v493, %v315
      %v503 = vsel %vm501, %v491, %v316
      %v504 = vsel %vm501, %v493, 0.0
      %s505 = scalar_lea.vmem [#allocation9], 8
      %506 = vst [vmem:[%s505] sm:$0xff] %v504
      %s507 = scalar_lea.vmem [#allocation4], 64
      %v508 = vld [vmem:[%s507] sm:$0xff]
      %v509 = vld [vmem:[%s507 + $0x8] sm:$0xff]
      %v510 = vld [vmem:[%s507 + $0x10] sm:$0xff]
      %v511 = vld [vmem:[%s507 + $0x18] sm:$0xff]
      %512 = vmatprep.subr.mxu0 %v69
      %513 = vmatpush1.msra.mxu0 %v68
      %514 = vmatprep.subr.mxu0 %v73
      %515 = vmatpush1.msra.mxu0 %v72
      %516 = vmatprep.subr.mxu0 %v77
      %517 = vmatpush1.msra.mxu0 %v76
      %518 = vmatprep.subr.mxu0 %v81
      %519 = vmatpush1.msra.mxu0 %v80
      %520 = vmatprep.subr.mxu0 %v85
      %521 = vmatpush1.msra.mxu0 %v84
      %522 = vmatprep.subr.mxu0 %v89
      %523 = vmatpush1.msra.mxu0 %v88
      %524 = vmatprep.subr.mxu0 %v93
      %525 = vmatpush1.msra.mxu0 %v92
      %526 = vmatprep.subr.mxu0 %v97
      %527 = vmatpush1.msra.mxu0 %v96
      %528 = vmatprep.subr.mxu0 %v101
      %529 = vmatpush1.msra.mxu0 %v100
      %530 = vmatprep.subr.mxu0 %v105
      %531 = vmatpush1.msra.mxu0 %v104
      %532 = vmatprep.subr.mxu0 %v109
      %533 = vmatpush1.msra.mxu0 %v108
      %534 = vmatprep.subr.mxu0 %v113
      %535 = vmatpush1.msra.mxu0 %v112
      %536 = vmatprep.subr.mxu0 %v117
      %537 = vmatpush1.msra.mxu0 %v116
      %538 = vmatprep.subr.mxu0 %v121
      %539 = vmatpush1.msra.mxu0 %v120
      %540 = vmatprep.subr.mxu0 %v125
      %541 = vmatpush1.msra.mxu0 %v124
      %542 = vmatprep.subr.mxu0 %v129
      %543 = vmatpush1.msra.mxu0 %v128
      %544 = vmatprep.subr.mxu0 0.0
      %545 = vmatpush1.msra.mxu0 0.0
      %546 = vmatprep.subr.mxu0 0.0
      %547 = vmatpush1.msra.mxu0 0.0
      %548 = vmatprep.subr.mxu0 0.0
      %549 = vmatpush1.msra.mxu0 0.0
      %550 = vmatprep.subr.mxu0 0.0
      %551 = vmatpush1.msra.mxu0 0.0
      %552 = vmatprep.subr.mxu0 0.0
      %553 = vmatpush1.msra.mxu0 0.0
      %554 = vmatprep.subr.mxu0 0.0
      %555 = vmatpush1.msra.mxu0 0.0
      %556 = vmatprep.subr.mxu0 0.0
      %557 = vmatpush1.msra.mxu0 0.0
      %558 = vmatprep.subr.mxu0 0.0
      %559 = vmatpush1.msra.mxu0 0.0
      %560 = vmatprep.subr.mxu0 0.0
      %561 = vmatpush1.msra.mxu0 0.0
      %562 = vmatprep.subr.mxu0 0.0
      %563 = vmatpush1.msra.mxu0 0.0
      %564 = vmatprep.subr.mxu0 0.0
      %565 = vmatpush1.msra.mxu0 0.0
      %566 = vmatprep.subr.mxu0 0.0
      %567 = vmatpush1.msra.mxu0 0.0
      %568 = vmatprep.subr.mxu0 0.0
      %569 = vmatpush1.msra.mxu0 0.0
      %570 = vmatprep.subr.mxu0 0.0
      %571 = vmatpush1.msra.mxu0 0.0
      %572 = vmatprep.subr.mxu0 0.0
      %573 = vmatpush1.msra.mxu0 0.0
      %574 = vmatprep.subr.mxu0 0.0
      %575 = vmatpush1.msra.mxu0 0.0
      %576 = vmatprep.mubr.f32.mxu0 0.0
      %577 = vmatmul.mubr.f32.gmra.mrb[0].mxu0 %v502
      %v578 = vpop.f32.mrb[0].mxu0
      %v579 = vadd.f32 0.0, %v578
      %v580 = vpop.f32.mrb[0].mxu0
      %v581 = vadd.f32 0.0, %v580
      %582 = vdwg.mxu0
      %583 = vmatprep.subr.mxu0 %v71
      %584 = vmatpush1.msra.mxu0 %v70
      %585 = vmatprep.subr.mxu0 %v75
      %586 = vmatpush1.msra.mxu0 %v74
      %587 = vmatprep.subr.mxu0 %v79
      %588 = vmatpush1.msra.mxu0 %v78
      %589 = vmatprep.subr.mxu0 %v83
      %590 = vmatpush1.msra.mxu0 %v82
      %591 = vmatprep.subr.mxu0 %v87
      %592 = vmatpush1.msra.mxu0 %v86
      %593 = vmatprep.subr.mxu0 %v91
      %594 = vmatpush1.msra.mxu0 %v90
      %595 = vmatprep.subr.mxu0 %v95
      %596 = vmatpush1.msra.mxu0 %v94
      %597 = vmatprep.subr.mxu0 %v99
      %598 = vmatpush1.msra.mxu0 %v98
      %599 = vmatprep.subr.mxu0 %v103
      %600 = vmatpush1.msra.mxu0 %v102
      %601 = vmatprep.subr.mxu0 %v107
      %602 = vmatpush1.msra.mxu0 %v106
      %603 = vmatprep.subr.mxu0 %v111
      %604 = vmatpush1.msra.mxu0 %v110
      %605 = vmatprep.subr.mxu0 %v115
      %606 = vmatpush1.msra.mxu0 %v114
      %607 = vmatprep.subr.mxu0 %v119
      %608 = vmatpush1.msra.mxu0 %v118
      %609 = vmatprep.subr.mxu0 %v123
      %610 = vmatpush1.msra.mxu0 %v122
      %611 = vmatprep.subr.mxu0 %v127
      %612 = vmatpush1.msra.mxu0 %v126
      %613 = vmatprep.subr.mxu0 %v131
      %614 = vmatpush1.msra.mxu0 %v130
      %615 = vmatprep.subr.mxu0 0.0
      %616 = vmatpush1.msra.mxu0 0.0
      %617 = vmatprep.subr.mxu0 0.0
      %618 = vmatpush1.msra.mxu0 0.0
      %619 = vmatprep.subr.mxu0 0.0
      %620 = vmatpush1.msra.mxu0 0.0
      %621 = vmatprep.subr.mxu0 0.0
      %622 = vmatpush1.msra.mxu0 0.0
      %623 = vmatprep.subr.mxu0 0.0
      %624 = vmatpush1.msra.mxu0 0.0
      %625 = vmatprep.subr.mxu0 0.0
      %626 = vmatpush1.msra.mxu0 0.0
      %627 = vmatprep.subr.mxu0 0.0
      %628 = vmatpush1.msra.mxu0 0.0
      %629 = vmatprep.subr.mxu0 0.0
      %630 = vmatpush1.msra.mxu0 0.0
      %631 = vmatprep.subr.mxu0 0.0
      %632 = vmatpush1.msra.mxu0 0.0
      %633 = vmatprep.subr.mxu0 0.0
      %634 = vmatpush1.msra.mxu0 0.0
      %635 = vmatprep.subr.mxu0 0.0
      %636 = vmatpush1.msra.mxu0 0.0
      %637 = vmatprep.subr.mxu0 0.0
      %638 = vmatpush1.msra.mxu0 0.0
      %639 = vmatprep.subr.mxu0 0.0
      %640 = vmatpush1.msra.mxu0 0.0
      %641 = vmatprep.subr.mxu0 0.0
      %642 = vmatpush1.msra.mxu0 0.0
      %643 = vmatprep.subr.mxu0 0.0
      %644 = vmatpush1.msra.mxu0 0.0
      %645 = vmatprep.subr.mxu0 0.0
      %646 = vmatpush1.msra.mxu0 0.0
      %647 = vmatprep.mubr.f32.mxu0 0.0
      %648 = vmatmul.mubr.f32.gmra.mrb[0].mxu0 %v502
      %v649 = vpop.f32.mrb[0].mxu0
      %v650 = vadd.f32 0.0, %v649
      %v651 = vpop.f32.mrb[0].mxu0
      %v652 = vadd.f32 0.0, %v651
      %653 = vdwg.mxu0
      %v654 = vadd.f32 %v508, %v579
      %v655 = vadd.f32 %v509, %v581
      %v656 = vadd.f32 %v510, %v650
      %v657 = vadd.f32 %v511, %v652
      %v658 = vxor.u32 %v654, 2147483648
      %v659 = vxor.u32 %v655, 2147483648
      %v660 = vxor.u32 %v656, 2147483648
      %v661 = vmul.f32 %v658, 1.442695
      %v662 = vpow.pop %v661
      %v663 = vmul.f32 %v659, 1.442695
      %v664 = vpow.pop %v663
      %v665 = vmul.f32 %v660, 1.442695
      %v666 = vpow.pop %v665
      %v667 = vadd.f32 %v662, 1.0
      %v668 = vadd.f32 %v664, 1.0
      %v669 = vadd.f32 %v666, 1.0
      %v670 = vrcp.pop %v667
      %v671 = vmul.f32 1.0, %v670
      %v672 = vrcp.pop %v668
      %v673 = vmul.f32 1.0, %v672
      %v674 = vrcp.pop %v669
      %v675 = vmul.f32 1.0, %v674
      %v676 = vtanh.pop %v657
      %v677 = vmul.f32 %v673, %v503
      %v678 = vmul.f32 %v671, %v676
      %v679 = vadd.f32 %v677, %v678
      %v680 = vtanh.pop %v679
      %v681 = vmul.f32 %v675, %v680
      %s682 = sadd.s32 %s54, 2
      %v683 = vstv %s682
      %vm684 = vcmp.lt.s32.totalorder %v683, %v67
      %v685 = vsel %vm684, 1, 0
      %686 = vset.pattern.permute.xlu0 0
      %687 = vperm.xlu0 %686, %v685
      %v688 = vpop.permute.xlu0 %687
      %vm689 = vcmp.eq.s32.totalorder %v688, 1
      %v690 = vsel %vm689, %v681, %v502
      %v691 = vsel %vm689, %v679, %v503
      %v692 = vsel %vm689, %v681, 0.0
      %s693 = scalar_lea.vmem [#allocation9], 16
      %694 = vst [vmem:[%s693] sm:$0xff] %v692
      %s695 = scalar_lea.vmem [#allocation4], 96
      %v696 = vld [vmem:[%s695] sm:$0xff]
      %v697 = vld [vmem:[%s695 + $0x8] sm:$0xff]
      %v698 = vld [vmem:[%s695 + $0x10] sm:$0xff]
      %v699 = vld [vmem:[%s695 + $0x18] sm:$0xff]
      %700 = vmatprep.subr.mxu0 %v69
      %701 = vmatpush1.msra.mxu0 %v68
      %702 = vmatprep.subr.mxu0 %v73
      %703 = vmatpush1.msra.mxu0 %v72
      %704 = vmatprep.subr.mxu0 %v77
      %705 = vmatpush1.msra.mxu0 %v76
      %706 = vmatprep.subr.mxu0 %v81
      %707 = vmatpush1.msra.mxu0 %v80
      %708 = vmatprep.subr.mxu0 %v85
      %709 = vmatpush1.msra.mxu0 %v84
      %710 = vmatprep.subr.mxu0 %v89
      %711 = vmatpush1.msra.mxu0 %v88
      %712 = vmatprep.subr.mxu0 %v93
      %713 = vmatpush1.msra.mxu0 %v92
      %714 = vmatprep.subr.mxu0 %v97
      %715 = vmatpush1.msra.mxu0 %v96
      %716 = vmatprep.subr.mxu0 %v101
      %717 = vmatpush1.msra.mxu0 %v100
      %718 = vmatprep.subr.mxu0 %v105
      %719 = vmatpush1.msra.mxu0 %v104
      %720 = vmatprep.subr.mxu0 %v109
      %721 = vmatpush1.msra.mxu0 %v108
      %722 = vmatprep.subr.mxu0 %v113
      %723 = vmatpush1.msra.mxu0 %v112
      %724 = vmatprep.subr.mxu0 %v117
      %725 = vmatpush1.msra.mxu0 %v116
      %726 = vmatprep.subr.mxu0 %v121
      %727 = vmatpush1.msra.mxu0 %v120
      %728 = vmatprep.subr.mxu0 %v125
      %729 = vmatpush1.msra.mxu0 %v124
      %730 = vmatprep.subr.mxu0 %v129
      %731 = vmatpush1.msra.mxu0 %v128
      %732 = vmatprep.subr.mxu0 0.0
      %733 = vmatpush1.msra.mxu0 0.0
      %734 = vmatprep.subr.mxu0 0.0
      %735 = vmatpush1.msra.mxu0 0.0
      %736 = vmatprep.subr.mxu0 0.0
      %737 = vmatpush1.msra.mxu0 0.0
      %738 = vmatprep.subr.mxu0 0.0
      %739 = vmatpush1.msra.mxu0 0.0
      %740 = vmatprep.subr.mxu0 0.0
      %741 = vmatpush1.msra.mxu0 0.0
      %742 = vmatprep.subr.mxu0 0.0
      %743 = vmatpush1.msra.mxu0 0.0
      %744 = vmatprep.subr.mxu0 0.0
      %745 = vmatpush1.msra.mxu0 0.0
      %746 = vmatprep.subr.mxu0 0.0
      %747 = vmatpush1.msra.mxu0 0.0
      %748 = vmatprep.subr.mxu0 0.0
      %749 = vmatpush1.msra.mxu0 0.0
      %750 = vmatprep.subr.mxu0 0.0
      %751 = vmatpush1.msra.mxu0 0.0
      %752 = vmatprep.subr.mxu0 0.0
      %753 = vmatpush1.msra.mxu0 0.0
      %754 = vmatprep.subr.mxu0 0.0
      %755 = vmatpush1.msra.mxu0 0.0
      %756 = vmatprep.subr.mxu0 0.0
      %757 = vmatpush1.msra.mxu0 0.0
      %758 = vmatprep.subr.mxu0 0.0
      %759 = vmatpush1.msra.mxu0 0.0
      %760 = vmatprep.subr.mxu0 0.0
      %761 = vmatpush1.msra.mxu0 0.0
      %762 = vmatprep.subr.mxu0 0.0
      %763 = vmatpush1.msra.mxu0 0.0
      %764 = vmatprep.mubr.f32.mxu0 0.0
      %765 = vmatmul.mubr.f32.gmra.mrb[0].mxu0 %v690
      %v766 = vpop.f32.mrb[0].mxu0
      %v767 = vadd.f32 0.0, %v766
      %v768 = vpop.f32.mrb[0].mxu0
      %v769 = vadd.f32 0.0, %v768
      %770 = vdwg.mxu0
      %771 = vmatprep.subr.mxu0 %v71
      %772 = vmatpush1.msra.mxu0 %v70
      %773 = vmatprep.subr.mxu0 %v75
      %774 = vmatpush1.msra.mxu0 %v74
      %775 = vmatprep.subr.mxu0 %v79
      %776 = vmatpush1.msra.mxu0 %v78
      %777 = vmatprep.subr.mxu0 %v83
      %778 = vmatpush1.msra.mxu0 %v82
      %779 = vmatprep.subr.mxu0 %v87
      %780 = vmatpush1.msra.mxu0 %v86
      %781 = vmatprep.subr.mxu0 %v91
      %782 = vmatpush1.msra.mxu0 %v90
      %783 = vmatprep.subr.mxu0 %v95
      %784 = vmatpush1.msra.mxu0 %v94
      %785 = vmatprep.subr.mxu0 %v99
      %786 = vmatpush1.msra.mxu0 %v98
      %787 = vmatprep.subr.mxu0 %v103
      %788 = vmatpush1.msra.mxu0 %v102
      %789 = vmatprep.subr.mxu0 %v107
      %790 = vmatpush1.msra.mxu0 %v106
      %791 = vmatprep.subr.mxu0 %v111
      %792 = vmatpush1.msra.mxu0 %v110
      %793 = vmatprep.subr.mxu0 %v115
      %794 = vmatpush1.msra.mxu0 %v114
      %795 = vmatprep.subr.mxu0 %v119
      %796 = vmatpush1.msra.mxu0 %v118
      %797 = vmatprep.subr.mxu0 %v123
      %798 = vmatpush1.msra.mxu0 %v122
      %799 = vmatprep.subr.mxu0 %v127
      %800 = vmatpush1.msra.mxu0 %v126
      %801 = vmatprep.subr.mxu0 %v131
      %802 = vmatpush1.msra.mxu0 %v130
      %803 = vmatprep.subr.mxu0 0.0
      %804 = vmatpush1.msra.mxu0 0.0
      %805 = vmatprep.subr.mxu0 0.0
      %806 = vmatpush1.msra.mxu0 0.0
      %807 = vmatprep.subr.mxu0 0.0
      %808 = vmatpush1.msra.mxu0 0.0
      %809 = vmatprep.subr.mxu0 0.0
      %810 = vmatpush1.msra.mxu0 0.0
      %811 = vmatprep.subr.mxu0 0.0
      %812 = vmatpush1.msra.mxu0 0.0
      %813 = vmatprep.subr.mxu0 0.0
      %814 = vmatpush1.msra.mxu0 0.0
      %815 = vmatprep.subr.mxu0 0.0
      %816 = vmatpush1.msra.mxu0 0.0
      %817 = vmatprep.subr.mxu0 0.0
      %818 = vmatpush1.msra.mxu0 0.0
      %819 = vmatprep.subr.mxu0 0.0
      %820 = vmatpush1.msra.mxu0 0.0
      %821 = vmatprep.subr.mxu0 0.0
      %822 = vmatpush1.msra.mxu0 0.0
      %823 = vmatprep.subr.mxu0 0.0
      %824 = vmatpush1.msra.mxu0 0.0
      %825 = vmatprep.subr.mxu0 0.0
      %826 = vmatpush1.msra.mxu0 0.0
      %827 = vmatprep.subr.mxu0 0.0
      %828 = vmatpush1.msra.mxu0 0.0
      %829 = vmatprep.subr.mxu0 0.0
      %830 = vmatpush1.msra.mxu0 0.0
      %831 = vmatprep.subr.mxu0 0.0
      %832 = vmatpush1.msra.mxu0 0.0
      %833 = vmatprep.subr.mxu0 0.0
      %834 = vmatpush1.msra.mxu0 0.0
      %835 = vmatprep.mubr.f32.mxu0 0.0
      %836 = vmatmul.mubr.f32.gmra.mrb[0].mxu0 %v690
      %v837 = vpop.f32.mrb[0].mxu0
      %v838 = vadd.f32 0.0, %v837
      %v839 = vpop.f32.mrb[0].mxu0
      %v840 = vadd.f32 0.0, %v839
      %841 = vdwg.mxu0
      %v842 = vadd.f32 %v696, %v767
      %v843 = vadd.f32 %v697, %v769
      %v844 = vadd.f32 %v698, %v838
      %v845 = vadd.f32 %v699, %v840
      %v846 = vxor.u32 %v842, 2147483648
      %v847 = vxor.u32 %v843, 2147483648
      %v848 = vxor.u32 %v844, 2147483648
      %v849 = vmul.f32 %v846, 1.442695
      %v850 = vpow.pop %v849
      %v851 = vmul.f32 %v847, 1.442695
      %v852 = vpow.pop %v851
      %v853 = vmul.f32 %v848, 1.442695
      %v854 = vpow.pop %v853
      %v855 = vadd.f32 %v850, 1.0
      %v856 = vadd.f32 %v852, 1.0
      %v857 = vadd.f32 %v854, 1.0
      %v858 = vrcp.pop %v855
      %v859 = vmul.f32 1.0, %v858
      %v860 = vrcp.pop %v856
      %v861 = vmul.f32 1.0, %v860
      %v862 = vrcp.pop %v857
      %v863 = vmul.f32 1.0, %v862
      %v864 = vtanh.pop %v845
      %v865 = vmul.f32 %v861, %v691
      %v866 = vmul.f32 %v859, %v864
      %v867 = vadd.f32 %v865, %v866
      %v868 = vtanh.pop %v867
      %v869 = vmul.f32 %v863, %v868
      %s870 = sadd.s32 %s54, 3
      %v871 = vstv %s870
      %vm872 = vcmp.lt.s32.totalorder %v871, %v67
      %v873 = vsel %vm872, 1, 0
      %874 = vset.pattern.permute.xlu0 0
      %875 = vperm.xlu0 %874, %v873
      %v876 = vpop.permute.xlu0 %875
      %vm877 = vcmp.eq.s32.totalorder %v876, 1
      %v878 = vsel %vm877, %v869, %v690
      %v879 = vsel %vm877, %v867, %v691
      %v880 = vsel %vm877, %v869, 0.0
      %s881 = scalar_lea.vmem [#allocation9], 24
      %882 = vst [vmem:[%s881] sm:$0xff] %v880
      %s883 = scalar_lea.vmem [#allocation4], 128
      %v884 = vld [vmem:[%s883] sm:$0xff]
      %v885 = vld [vmem:[%s883 + $0x8] sm:$0xff]
      %v886 = vld [vmem:[%s883 + $0x10] sm:$0xff]
      %v887 = vld [vmem:[%s883 + $0x18] sm:$0xff]
      %888 = vmatprep.subr.mxu0 %v69
      %889 = vmatpush1.msra.mxu0 %v68
      %890 = vmatprep.subr.mxu0 %v73
      %891 = vmatpush1.msra.mxu0 %v72
      %892 = vmatprep.subr.mxu0 %v77
      %893 = vmatpush1.msra.mxu0 %v76
      %894 = vmatprep.subr.mxu0 %v81
      %895 = vmatpush1.msra.mxu0 %v80
      %896 = vmatprep.subr.mxu0 %v85
      %897 = vmatpush1.msra.mxu0 %v84
      %898 = vmatprep.subr.mxu0 %v89
      %899 = vmatpush1.msra.mxu0 %v88
      %900 = vmatprep.subr.mxu0 %v93
      %901 = vmatpush1.msra.mxu0 %v92
      %902 = vmatprep.subr.mxu0 %v97
      %903 = vmatpush1.msra.mxu0 %v96
      %904 = vmatprep.subr.mxu0 %v101
      %905 = vmatpush1.msra.mxu0 %v100
      %906 = vmatprep.subr.mxu0 %v105
      %907 = vmatpush1.msra.mxu0 %v104
      %908 = vmatprep.subr.mxu0 %v109
      %909 = vmatpush1.msra.mxu0 %v108
      %910 = vmatprep.subr.mxu0 %v113
      %911 = vmatpush1.msra.mxu0 %v112
      %912 = vmatprep.subr.mxu0 %v117
      %913 = vmatpush1.msra.mxu0 %v116
      %914 = vmatprep.subr.mxu0 %v121
      %915 = vmatpush1.msra.mxu0 %v120
      %916 = vmatprep.subr.mxu0 %v125
      %917 = vmatpush1.msra.mxu0 %v124
      %918 = vmatprep.subr.mxu0 %v129
      %919 = vmatpush1.msra.mxu0 %v128
      %920 = vmatprep.subr.mxu0 0.0
      %921 = vmatpush1.msra.mxu0 0.0
      %922 = vmatprep.subr.mxu0 0.0
      %923 = vmatpush1.msra.mxu0 0.0
      %924 = vmatprep.subr.mxu0 0.0
      %925 = vmatpush1.msra.mxu0 0.0
      %926 = vmatprep.subr.mxu0 0.0
      %927 = vmatpush1.msra.mxu0 0.0
      %928 = vmatprep.subr.mxu0 0.0
      %929 = vmatpush1.msra.mxu0 0.0
      %930 = vmatprep.subr.mxu0 0.0
      %931 = vmatpush1.msra.mxu0 0.0
      %932 = vmatprep.subr.mxu0 0.0
      %933 = vmatpush1.msra.mxu0 0.0
      %934 = vmatprep.subr.mxu0 0.0
      %935 = vmatpush1.msra.mxu0 0.0
      %936 = vmatprep.subr.mxu0 0.0
      %937 = vmatpush1.msra.mxu0 0.0
      %938 = vmatprep.subr.mxu0 0.0
      %939 = vmatpush1.msra.mxu0 0.0
      %940 = vmatprep.subr.mxu0 0.0
      %941 = vmatpush1.msra.mxu0 0.0
      %942 = vmatprep.subr.mxu0 0.0
      %943 = vmatpush1.msra.mxu0 0.0
      %944 = vmatprep.subr.mxu0 0.0
      %945 = vmatpush1.msra.mxu0 0.0
      %946 = vmatprep.subr.mxu0 0.0
      %947 = vmatpush1.msra.mxu0 0.0
      %948 = vmatprep.subr.mxu0 0.0
      %949 = vmatpush1.msra.mxu0 0.0
      %950 = vmatprep.subr.mxu0 0.0
      %951 = vmatpush1.msra.mxu0 0.0
      %952 = vmatprep.mubr.f32.mxu0 0.0
      %953 = vmatmul.mubr.f32.gmra.mrb[0].mxu0 %v878
      %v954 = vpop.f32.mrb[0].mxu0
      %v955 = vadd.f32 0.0, %v954
      %v956 = vpop.f32.mrb[0].mxu0
      %v957 = vadd.f32 0.0, %v956
      %958 = vdwg.mxu0
      %959 = vmatprep.subr.mxu0 %v71
      %960 = vmatpush1.msra.mxu0 %v70
      %961 = vmatprep.subr.mxu0 %v75
      %962 = vmatpush1.msra.mxu0 %v74
      %963 = vmatprep.subr.mxu0 %v79
      %964 = vmatpush1.msra.mxu0 %v78
      %965 = vmatprep.subr.mxu0 %v83
      %966 = vmatpush1.msra.mxu0 %v82
      %967 = vmatprep.subr.mxu0 %v87
      %968 = vmatpush1.msra.mxu0 %v86
      %969 = vmatprep.subr.mxu0 %v91
      %970 = vmatpush1.msra.mxu0 %v90
      %971 = vmatprep.subr.mxu0 %v95
      %972 = vmatpush1.msra.mxu0 %v94
      %973 = vmatprep.subr.mxu0 %v99
      %974 = vmatpush1.msra.mxu0 %v98
      %975 = vmatprep.subr.mxu0 %v103
      %976 = vmatpush1.msra.mxu0 %v102
      %977 = vmatprep.subr.mxu0 %v107
      %978 = vmatpush1.msra.mxu0 %v106
      %979 = vmatprep.subr.mxu0 %v111
      %980 = vmatpush1.msra.mxu0 %v110
      %981 = vmatprep.subr.mxu0 %v115
      %982 = vmatpush1.msra.mxu0 %v114
      %983 = vmatprep.subr.mxu0 %v119
      %984 = vmatpush1.msra.mxu0 %v118
      %985 = vmatprep.subr.mxu0 %v123
      %986 = vmatpush1.msra.mxu0 %v122
      %987 = vmatprep.subr.mxu0 %v127
      %988 = vmatpush1.msra.mxu0 %v126
      %989 = vmatprep.subr.mxu0 %v131
      %990 = vmatpush1.msra.mxu0 %v130
      %991 = vmatprep.subr.mxu0 0.0
      %992 = vmatpush1.msra.mxu0 0.0
      %993 = vmatprep.subr.mxu0 0.0
      %994 = vmatpush1.msra.mxu0 0.0
      %995 = vmatprep.subr.mxu0 0.0
      %996 = vmatpush1.msra.mxu0 0.0
      %997 = vmatprep.subr.mxu0 0.0
      %998 = vmatpush1.msra.mxu0 0.0
      %999 = vmatprep.subr.mxu0 0.0
      %1000 = vmatpush1.msra.mxu0 0.0
      %1001 = vmatprep.subr.mxu0 0.0
      %1002 = vmatpush1.msra.mxu0 0.0
      %1003 = vmatprep.subr.mxu0 0.0
      %1004 = vmatpush1.msra.mxu0 0.0
      %1005 = vmatprep.subr.mxu0 0.0
      %1006 = vmatpush1.msra.mxu0 0.0
      %1007 = vmatprep.subr.mxu0 0.0
      %1008 = vmatpush1.msra.mxu0 0.0
      %1009 = vmatprep.subr.mxu0 0.0
      %1010 = vmatpush1.msra.mxu0 0.0
      %1011 = vmatprep.subr.mxu0 0.0
      %1012 = vmatpush1.msra.mxu0 0.0
      %1013 = vmatprep.subr.mxu0 0.0
      %1014 = vmatpush1.msra.mxu0 0.0
      %1015 = vmatprep.subr.mxu0 0.0
      %1016 = vmatpush1.msra.mxu0 0.0
      %1017 = vmatprep.subr.mxu0 0.0
      %1018 = vmatpush1.msra.mxu0 0.0
      %1019 = vmatprep.subr.mxu0 0.0
      %1020 = vmatpush1.msra.mxu0 0.0
      %1021 = vmatprep.subr.mxu0 0.0
      %1022 = vmatpush1.msra.mxu0 0.0
      %1023 = vmatprep.mubr.f32.mxu0 0.0
      %1024 = vmatmul.mubr.f32.gmra.mrb[0].mxu0 %v878
      %v1025 = vpop.f32.mrb[0].mxu0
      %v1026 = vadd.f32 0.0, %v1025
      %v1027 = vpop.f32.mrb[0].mxu0
      %v1028 = vadd.f32 0.0, %v1027
      %1029 = vdwg.mxu0
      %v1030 = vadd.f32 %v884, %v955
      %v1031 = vadd.f32 %v885, %v957
      %v1032 = vadd.f32 %v886, %v1026
      %v1033 = vadd.f32 %v887, %v1028
      %v1034 = vxor.u32 %v1030, 2147483648
      %v1035 = vxor.u32 %v1031, 2147483648
      %v1036 = vxor.u32 %v1032, 2147483648
      %v1037 = vmul.f32 %v1034, 1.442695
      %v1038 = vpow.pop %v1037
      %v1039 = vmul.f32 %v1035, 1.442695
      %v1040 = vpow.pop %v1039
      %v1041 = vmul.f32 %v1036, 1.442695
      %v1042 = vpow.pop %v1041
      %v1043 = vadd.f32 %v1038, 1.0
      %v1044 = vadd.f32 %v1040, 1.0
      %v1045 = vadd.f32 %v1042, 1.0
      %v1046 = vrcp.pop %v1043
      %v1047 = vmul.f32 1.0, %v1046
      %v1048 = vrcp.pop %v1044
      %v1049 = vmul.f32 1.0, %v1048
      %v1050 = vrcp.pop %v1045
      %v1051 = vmul.f32 1.0, %v1050
      %v1052 = vtanh.pop %v1033
      %v1053 = vmul.f32 %v1049, %v879
      %v1054 = vmul.f32 %v1047, %v1052
      %v1055 = vadd.f32 %v1053, %v1054
      %v1056 = vtanh.pop %v1055
      %v1057 = vmul.f32 %v1051, %v1056
      %s1058 = sadd.s32 %s54, 4
      %v1059 = vstv %s1058
      %vm1060 = vcmp.lt.s32.totalorder %v1059, %v67
      %v1061 = vsel %vm1060, 1, 0
      %1062 = vset.pattern.permute.xlu0 0
      %1063 = vperm.xlu0 %1062, %v1061
      %v1064 = vpop.permute.xlu0 %1063
      %vm1065 = vcmp.eq.s32.totalorder %v1064, 1
      %v1066 = vsel %vm1065, %v1057, %v878
      %v1067 = vsel %vm1065, %v1055, %v879
      %v1068 = vsel %vm1065, %v1057, 0.0
      %s1069 = scalar_lea.vmem [#allocation9], 32
      %1070 = vst [vmem:[%s1069] sm:$0xff] %v1068
      %s1071 = scalar_lea.vmem [#allocation4], 160
      %v1072 = vld [vmem:[%s1071] sm:$0xff]
      %v1073 = vld [vmem:[%s1071 + $0x8] sm:$0xff]
      %v1074 = vld [vmem:[%s1071 + $0x10] sm:$0xff]
      %v1075 = vld [vmem:[%s1071 + $0x18] sm:$0xff]
      %1076 = vmatprep.subr.mxu0 %v69
      %1077 = vmatpush1.msra.mxu0 %v68
      %1078 = vmatprep.subr.mxu0 %v73
      %1079 = vmatpush1.msra.mxu0 %v72
      %1080 = vmatprep.subr.mxu0 %v77
      %1081 = vmatpush1.msra.mxu0 %v76
      %1082 = vmatprep.subr.mxu0 %v81
      %1083 = vmatpush1.msra.mxu0 %v80
      %1084 = vmatprep.subr.mxu0 %v85
      %1085 = vmatpush1.msra.mxu0 %v84
      %1086 = vmatprep.subr.mxu0 %v89
      %1087 = vmatpush1.msra.mxu0 %v88
      %1088 = vmatprep.subr.mxu0 %v93
      %1089 = vmatpush1.msra.mxu0 %v92
      %1090 = vmatprep.subr.mxu0 %v97
      %1091 = vmatpush1.msra.mxu0 %v96
      %1092 = vmatprep.subr.mxu0 %v101
      %1093 = vmatpush1.msra.mxu0 %v100
      %1094 = vmatprep.subr.mxu0 %v105
      %1095 = vmatpush1.msra.mxu0 %v104
      %1096 = vmatprep.subr.mxu0 %v109
      %1097 = vmatpush1.msra.mxu0 %v108
      %1098 = vmatprep.subr.mxu0 %v113
      %1099 = vmatpush1.msra.mxu0 %v112
      %1100 = vmatprep.subr.mxu0 %v117
      %1101 = vmatpush1.msra.mxu0 %v116
      %1102 = vmatprep.subr.mxu0 %v121
      %1103 = vmatpush1.msra.mxu0 %v120
      %1104 = vmatprep.subr.mxu0 %v125
      %1105 = vmatpush1.msra.mxu0 %v124
      %1106 = vmatprep.subr.mxu0 %v129
      %1107 = vmatpush1.msra.mxu0 %v128
      %1108 = vmatprep.subr.mxu0 0.0
      %1109 = vmatpush1.msra.mxu0 0.0
      %1110 = vmatprep.subr.mxu0 0.0
      %1111 = vmatpush1.msra.mxu0 0.0
      %1112 = vmatprep.subr.mxu0 0.0
      %1113 = vmatpush1.msra.mxu0 0.0
      %1114 = vmatprep.subr.mxu0 0.0
      %1115 = vmatpush1.msra.mxu0 0.0
      %1116 = vmatprep.subr.mxu0 0.0
      %1117 = vmatpush1.msra.mxu0 0.0
      %1118 = vmatprep.subr.mxu0 0.0
      %1119 = vmatpush1.msra.mxu0 0.0
      %1120 = vmatprep.subr.mxu0 0.0
      %1121 = vmatpush1.msra.mxu0 0.0
      %1122 = vmatprep.subr.mxu0 0.0
      %1123 = vmatpush1.msra.mxu0 0.0
      %1124 = vmatprep.subr.mxu0 0.0
      %1125 = vmatpush1.msra.mxu0 0.0
      %1126 = vmatprep.subr.mxu0 0.0
      %1127 = vmatpush1.msra.mxu0 0.0
      %1128 = vmatprep.subr.mxu0 0.0
      %1129 = vmatpush1.msra.mxu0 0.0
      %1130 = vmatprep.subr.mxu0 0.0
      %1131 = vmatpush1.msra.mxu0 0.0
      %1132 = vmatprep.subr.mxu0 0.0
      %1133 = vmatpush1.msra.mxu0 0.0
      %1134 = vmatprep.subr.mxu0 0.0
      %1135 = vmatpush1.msra.mxu0 0.0
      %1136 = vmatprep.subr.mxu0 0.0
      %1137 = vmatpush1.msra.mxu0 0.0
      %1138 = vmatprep.subr.mxu0 0.0
      %1139 = vmatpush1.msra.mxu0 0.0
      %1140 = vmatprep.mubr.f32.mxu0 0.0
      %1141 = vmatmul.mubr.f32.gmra.mrb[0].mxu0 %v1066
      %v1142 = vpop.f32.mrb[0].mxu0
      %v1143 = vadd.f32 0.0, %v1142
      %v1144 = vpop.f32.mrb[0].mxu0
      %v1145 = vadd.f32 0.0, %v1144
      %1146 = vdwg.mxu0
      %1147 = vmatprep.subr.mxu0 %v71
      %1148 = vmatpush1.msra.mxu0 %v70
      %1149 = vmatprep.subr.mxu0 %v75
      %1150 = vmatpush1.msra.mxu0 %v74
      %1151 = vmatprep.subr.mxu0 %v79
      %1152 = vmatpush1.msra.mxu0 %v78
      %1153 = vmatprep.subr.mxu0 %v83
      %1154 = vmatpush1.msra.mxu0 %v82
      %1155 = vmatprep.subr.mxu0 %v87
      %1156 = vmatpush1.msra.mxu0 %v86
      %1157 = vmatprep.subr.mxu0 %v91
      %1158 = vmatpush1.msra.mxu0 %v90
      %1159 = vmatprep.subr.mxu0 %v95
      %1160 = vmatpush1.msra.mxu0 %v94
      %1161 = vmatprep.subr.mxu0 %v99
      %1162 = vmatpush1.msra.mxu0 %v98
      %1163 = vmatprep.subr.mxu0 %v103
      %1164 = vmatpush1.msra.mxu0 %v102
      %1165 = vmatprep.subr.mxu0 %v107
      %1166 = vmatpush1.msra.mxu0 %v106
      %1167 = vmatprep.subr.mxu0 %v111
      %1168 = vmatpush1.msra.mxu0 %v110
      %1169 = vmatprep.subr.mxu0 %v115
      %1170 = vmatpush1.msra.mxu0 %v114
      %1171 = vmatprep.subr.mxu0 %v119
      %1172 = vmatpush1.msra.mxu0 %v118
      %1173 = vmatprep.subr.mxu0 %v123
      %1174 = vmatpush1.msra.mxu0 %v122
      %1175 = vmatprep.subr.mxu0 %v127
      %1176 = vmatpush1.msra.mxu0 %v126
      %1177 = vmatprep.subr.mxu0 %v131
      %1178 = vmatpush1.msra.mxu0 %v130
      %1179 = vmatprep.subr.mxu0 0.0
      %1180 = vmatpush1.msra.mxu0 0.0
      %1181 = vmatprep.subr.mxu0 0.0
      %1182 = vmatpush1.msra.mxu0 0.0
      %1183 = vmatprep.subr.mxu0 0.0
      %1184 = vmatpush1.msra.mxu0 0.0
      %1185 = vmatprep.subr.mxu0 0.0
      %1186 = vmatpush1.msra.mxu0 0.0
      %1187 = vmatprep.subr.mxu0 0.0
      %1188 = vmatpush1.msra.mxu0 0.0
      %1189 = vmatprep.subr.mxu0 0.0
      %1190 = vmatpush1.msra.mxu0 0.0
      %1191 = vmatprep.subr.mxu0 0.0
      %1192 = vmatpush1.msra.mxu0 0.0
      %1193 = vmatprep.subr.mxu0 0.0
      %1194 = vmatpush1.msra.mxu0 0.0
      %1195 = vmatprep.subr.mxu0 0.0
      %1196 = vmatpush1.msra.mxu0 0.0
      %1197 = vmatprep.subr.mxu0 0.0
      %1198 = vmatpush1.msra.mxu0 0.0
      %1199 = vmatprep.subr.mxu0 0.0
      %1200 = vmatpush1.msra.mxu0 0.0
      %1201 = vmatprep.subr.mxu0 0.0
      %1202 = vmatpush1.msra.mxu0 0.0
      %1203 = vmatprep.subr.mxu0 0.0
      %1204 = vmatpush1.msra.mxu0 0.0
      %1205 = vmatprep.subr.mxu0 0.0
      %1206 = vmatpush1.msra.mxu0 0.0
      %1207 = vmatprep.subr.mxu0 0.0
      %1208 = vmatpush1.msra.mxu0 0.0
      %1209 = vmatprep.subr.mxu0 0.0
      %1210 = vmatpush1.msra.mxu0 0.0
      %1211 = vmatprep.mubr.f32.mxu0 0.0
      %1212 = vmatmul.mubr.f32.gmra.mrb[0].mxu0 %v1066
      %v1213 = vpop.f32.mrb[0].mxu0
      %v1214 = vadd.f32 0.0, %v1213
      %v1215 = vpop.f32.mrb[0].mxu0
      %v1216 = vadd.f32 0.0, %v1215
      %1217 = vdwg.mxu0
      %v1218 = vadd.f32 %v1072, %v1143
      %v1219 = vadd.f32 %v1073, %v1145
      %v1220 = vadd.f32 %v1074, %v1214
      %v1221 = vadd.f32 %v1075, %v1216
      %v1222 = vxor.u32 %v1218, 2147483648
      %v1223 = vxor.u32 %v1219, 2147483648
      %v1224 = vxor.u32 %v1220, 2147483648
      %v1225 = vmul.f32 %v1222, 1.442695
      %v1226 = vpow.pop %v1225
      %v1227 = vmul.f32 %v1223, 1.442695
      %v1228 = vpow.pop %v1227
      %v1229 = vmul.f32 %v1224, 1.442695
      %v1230 = vpow.pop %v1229
      %v1231 = vadd.f32 %v1226, 1.0
      %v1232 = vadd.f32 %v1228, 1.0
      %v1233 = vadd.f32 %v1230, 1.0
      %v1234 = vrcp.pop %v1231
      %v1235 = vmul.f32 1.0, %v1234
      %v1236 = vrcp.pop %v1232
      %v1237 = vmul.f32 1.0, %v1236
      %v1238 = vrcp.pop %v1233
      %v1239 = vmul.f32 1.0, %v1238
      %v1240 = vtanh.pop %v1221
      %v1241 = vmul.f32 %v1237, %v1067
      %v1242 = vmul.f32 %v1235, %v1240
      %v1243 = vadd.f32 %v1241, %v1242
      %v1244 = vtanh.pop %v1243
      %v1245 = vmul.f32 %v1239, %v1244
      %s1246 = sadd.s32 %s54, 5
      %v1247 = vstv %s1246
      %vm1248 = vcmp.lt.s32.totalorder %v1247, %v67
      %v1249 = vsel %vm1248, 1, 0
      %1250 = vset.pattern.permute.xlu0 0
      %1251 = vperm.xlu0 %1250, %v1249
      %v1252 = vpop.permute.xlu0 %1251
      %vm1253 = vcmp.eq.s32.totalorder %v1252, 1
      %v1254 = vsel %vm1253, %v1245, %v1066
      %v1255 = vsel %vm1253, %v1243, %v1067
      %v1256 = vsel %vm1253, %v1245, 0.0
      %s1257 = scalar_lea.vmem [#allocation9], 40
      %1258 = vst [vmem:[%s1257] sm:$0xff] %v1256
      %s1259 = scalar_lea.vmem [#allocation4], 192
      %v1260 = vld [vmem:[%s1259] sm:$0xff]
      %v1261 = vld [vmem:[%s1259 + $0x8] sm:$0xff]
      %v1262 = vld [vmem:[%s1259 + $0x10] sm:$0xff]
      %v1263 = vld [vmem:[%s1259 + $0x18] sm:$0xff]
      %1264 = vmatprep.subr.mxu0 %v69
      %1265 = vmatpush1.msra.mxu0 %v68
      %1266 = vmatprep.subr.mxu0 %v73
      %1267 = vmatpush1.msra.mxu0 %v72
      %1268 = vmatprep.subr.mxu0 %v77
      %1269 = vmatpush1.msra.mxu0 %v76
      %1270 = vmatprep.subr.mxu0 %v81
      %1271 = vmatpush1.msra.mxu0 %v80
      %1272 = vmatprep.subr.mxu0 %v85
      %1273 = vmatpush1.msra.mxu0 %v84
      %1274 = vmatprep.subr.mxu0 %v89
      %1275 = vmatpush1.msra.mxu0 %v88
      %1276 = vmatprep.subr.mxu0 %v93
      %1277 = vmatpush1.msra.mxu0 %v92
      %1278 = vmatprep.subr.mxu0 %v97
      %1279 = vmatpush1.msra.mxu0 %v96
      %1280 = vmatprep.subr.mxu0 %v101
      %1281 = vmatpush1.msra.mxu0 %v100
      %1282 = vmatprep.subr.mxu0 %v105
      %1283 = vmatpush1.msra.mxu0 %v104
      %1284 = vmatprep.subr.mxu0 %v109
      %1285 = vmatpush1.msra.mxu0 %v108
      %1286 = vmatprep.subr.mxu0 %v113
      %1287 = vmatpush1.msra.mxu0 %v112
      %1288 = vmatprep.subr.mxu0 %v117
      %1289 = vmatpush1.msra.mxu0 %v116
      %1290 = vmatprep.subr.mxu0 %v121
      %1291 = vmatpush1.msra.mxu0 %v120
      %1292 = vmatprep.subr.mxu0 %v125
      %1293 = vmatpush1.msra.mxu0 %v124
      %1294 = vmatprep.subr.mxu0 %v129
      %1295 = vmatpush1.msra.mxu0 %v128
      %1296 = vmatprep.subr.mxu0 0.0
      %1297 = vmatpush1.msra.mxu0 0.0
      %1298 = vmatprep.subr.mxu0 0.0
      %1299 = vmatpush1.msra.mxu0 0.0
      %1300 = vmatprep.subr.mxu0 0.0
      %1301 = vmatpush1.msra.mxu0 0.0
      %1302 = vmatprep.subr.mxu0 0.0
      %1303 = vmatpush1.msra.mxu0 0.0
      %1304 = vmatprep.subr.mxu0 0.0
      %1305 = vmatpush1.msra.mxu0 0.0
      %1306 = vmatprep.subr.mxu0 0.0
      %1307 = vmatpush1.msra.mxu0 0.0
      %1308 = vmatprep.subr.mxu0 0.0
      %1309 = vmatpush1.msra.mxu0 0.0
      %1310 = vmatprep.subr.mxu0 0.0
      %1311 = vmatpush1.msra.mxu0 0.0
      %1312 = vmatprep.subr.mxu0 0.0
      %1313 = vmatpush1.msra.mxu0 0.0
      %1314 = vmatprep.subr.mxu0 0.0
      %1315 = vmatpush1.msra.mxu0 0.0
      %1316 = vmatprep.subr.mxu0 0.0
      %1317 = vmatpush1.msra.mxu0 0.0
      %1318 = vmatprep.subr.mxu0 0.0
      %1319 = vmatpush1.msra.mxu0 0.0
      %1320 = vmatprep.subr.mxu0 0.0
      %1321 = vmatpush1.msra.mxu0 0.0
      %1322 = vmatprep.subr.mxu0 0.0
      %1323 = vmatpush1.msra.mxu0 0.0
      %1324 = vmatprep.subr.mxu0 0.0
      %1325 = vmatpush1.msra.mxu0 0.0
      %1326 = vmatprep.subr.mxu0 0.0
      %1327 = vmatpush1.msra.mxu0 0.0
      %1328 = vmatprep.mubr.f32.mxu0 0.0
      %1329 = vmatmul.mubr.f32.gmra.mrb[0].mxu0 %v1254
      %v1330 = vpop.f32.mrb[0].mxu0
      %v1331 = vadd.f32 0.0, %v1330
      %v1332 = vpop.f32.mrb[0].mxu0
      %v1333 = vadd.f32 0.0, %v1332
      %1334 = vdwg.mxu0
      %1335 = vmatprep.subr.mxu0 %v71
      %1336 = vmatpush1.msra.mxu0 %v70
      %1337 = vmatprep.subr.mxu0 %v75
      %1338 = vmatpush1.msra.mxu0 %v74
      %1339 = vmatprep.subr.mxu0 %v79
      %1340 = vmatpush1.msra.mxu0 %v78
      %1341 = vmatprep.subr.mxu0 %v83
      %1342 = vmatpush1.msra.mxu0 %v82
      %1343 = vmatprep.subr.mxu0 %v87
      %1344 = vmatpush1.msra.mxu0 %v86
      %1345 = vmatprep.subr.mxu0 %v91
      %1346 = vmatpush1.msra.mxu0 %v90
      %1347 = vmatprep.subr.mxu0 %v95
      %1348 = vmatpush1.msra.mxu0 %v94
      %1349 = vmatprep.subr.mxu0 %v99
      %1350 = vmatpush1.msra.mxu0 %v98
      %1351 = vmatprep.subr.mxu0 %v103
      %1352 = vmatpush1.msra.mxu0 %v102
      %1353 = vmatprep.subr.mxu0 %v107
      %1354 = vmatpush1.msra.mxu0 %v106
      %1355 = vmatprep.subr.mxu0 %v111
      %1356 = vmatpush1.msra.mxu0 %v110
      %1357 = vmatprep.subr.mxu0 %v115
      %1358 = vmatpush1.msra.mxu0 %v114
      %1359 = vmatprep.subr.mxu0 %v119
      %1360 = vmatpush1.msra.mxu0 %v118
      %1361 = vmatprep.subr.mxu0 %v123
      %1362 = vmatpush1.msra.mxu0 %v122
      %1363 = vmatprep.subr.mxu0 %v127
      %1364 = vmatpush1.msra.mxu0 %v126
      %1365 = vmatprep.subr.mxu0 %v131
      %1366 = vmatpush1.msra.mxu0 %v130
      %1367 = vmatprep.subr.mxu0 0.0
      %1368 = vmatpush1.msra.mxu0 0.0
      %1369 = vmatprep.subr.mxu0 0.0
      %1370 = vmatpush1.msra.mxu0 0.0
      %1371 = vmatprep.subr.mxu0 0.0
      %1372 = vmatpush1.msra.mxu0 0.0
      %1373 = vmatprep.subr.mxu0 0.0
      %1374 = vmatpush1.msra.mxu0 0.0
      %1375 = vmatprep.subr.mxu0 0.0
      %1376 = vmatpush1.msra.mxu0 0.0
      %1377 = vmatprep.subr.mxu0 0.0
      %1378 = vmatpush1.msra.mxu0 0.0
      %1379 = vmatprep.subr.mxu0 0.0
      %1380 = vmatpush1.msra.mxu0 0.0
      %1381 = vmatprep.subr.mxu0 0.0
      %1382 = vmatpush1.msra.mxu0 0.0
      %1383 = vmatprep.subr.mxu0 0.0
      %1384 = vmatpush1.msra.mxu0 0.0
      %1385 = vmatprep.subr.mxu0 0.0
      %1386 = vmatpush1.msra.mxu0 0.0
      %1387 = vmatprep.subr.mxu0 0.0
      %1388 = vmatpush1.msra.mxu0 0.0
      %1389 = vmatprep.subr.mxu0 0.0
      %1390 = vmatpush1.msra.mxu0 0.0
      %1391 = vmatprep.subr.mxu0 0.0
      %1392 = vmatpush1.msra.mxu0 0.0
      %1393 = vmatprep.subr.mxu0 0.0
      %1394 = vmatpush1.msra.mxu0 0.0
      %1395 = vmatprep.subr.mxu0 0.0
      %1396 = vmatpush1.msra.mxu0 0.0
      %1397 = vmatprep.subr.mxu0 0.0
      %1398 = vmatpush1.msra.mxu0 0.0
      %1399 = vmatprep.mubr.f32.mxu0 0.0
      %1400 = vmatmul.mubr.f32.gmra.mrb[0].mxu0 %v1254
      %v1401 = vpop.f32.mrb[0].mxu0
      %v1402 = vadd.f32 0.0, %v1401
      %v1403 = vpop.f32.mrb[0].mxu0
      %v1404 = vadd.f32 0.0, %v1403
      %1405 = vdwg.mxu0
      %v1406 = vadd.f32 %v1260, %v1331
      %v1407 = vadd.f32 %v1261, %v1333
      %v1408 = vadd.f32 %v1262, %v1402
      %v1409 = vadd.f32 %v1263, %v1404
      %v1410 = vxor.u32 %v1406, 2147483648
      %v1411 = vxor.u32 %v1407, 2147483648
      %v1412 = vxor.u32 %v1408, 2147483648
      %v1413 = vmul.f32 %v1410, 1.442695
      %v1414 = vpow.pop %v1413
      %v1415 = vmul.f32 %v1411, 1.442695
      %v1416 = vpow.pop %v1415
      %v1417 = vmul.f32 %v1412, 1.442695
      %v1418 = vpow.pop %v1417
      %v1419 = vadd.f32 %v1414, 1.0
      %v1420 = vadd.f32 %v1416, 1.0
      %v1421 = vadd.f32 %v1418, 1.0
      %v1422 = vrcp.pop %v1419
      %v1423 = vmul.f32 1.0, %v1422
      %v1424 = vrcp.pop %v1420
      %v1425 = vmul.f32 1.0, %v1424
      %v1426 = vrcp.pop %v1421
      %v1427 = vmul.f32 1.0, %v1426
      %v1428 = vtanh.pop %v1409
      %v1429 = vmul.f32 %v1425, %v1255
      %v1430 = vmul.f32 %v1423, %v1428
      %v1431 = vadd.f32 %v1429, %v1430
      %v1432 = vtanh.pop %v1431
      %v1433 = vmul.f32 %v1427, %v1432
      %s1434 = sadd.s32 %s54, 6
      %v1435 = vstv %s1434
      %vm1436 = vcmp.lt.s32.totalorder %v1435, %v67
      %v1437 = vsel %vm1436, 1, 0
      %1438 = vset.pattern.permute.xlu0 0
      %1439 = vperm.xlu0 %1438, %v1437
      %v1440 = vpop.permute.xlu0 %1439
      %vm1441 = vcmp.eq.s32.totalorder %v1440, 1
      %v1442 = vsel %vm1441, %v1433, %v1254
      %v1443 = vsel %vm1441, %v1431, %v1255
      %v1444 = vsel %vm1441, %v1433, 0.0
      %s1445 = scalar_lea.vmem [#allocation9], 48
      %1446 = vst [vmem:[%s1445] sm:$0xff] %v1444
      %s1447 = scalar_lea.vmem [#allocation4], 224
      %v1448 = vld [vmem:[%s1447] sm:$0xff]
      %v1449 = vld [vmem:[%s1447 + $0x8] sm:$0xff]
      %v1450 = vld [vmem:[%s1447 + $0x10] sm:$0xff]
      %v1451 = vld [vmem:[%s1447 + $0x18] sm:$0xff]
      %1452 = vmatprep.subr.mxu0 %v69
      %1453 = vmatpush1.msra.mxu0 %v68
      %1454 = vmatprep.subr.mxu0 %v73
      %1455 = vmatpush1.msra.mxu0 %v72
      %1456 = vmatprep.subr.mxu0 %v77
      %1457 = vmatpush1.msra.mxu0 %v76
      %1458 = vmatprep.subr.mxu0 %v81
      %1459 = vmatpush1.msra.mxu0 %v80
      %1460 = vmatprep.subr.mxu0 %v85
      %1461 = vmatpush1.msra.mxu0 %v84
      %1462 = vmatprep.subr.mxu0 %v89
      %1463 = vmatpush1.msra.mxu0 %v88
      %1464 = vmatprep.subr.mxu0 %v93
      %1465 = vmatpush1.msra.mxu0 %v92
      %1466 = vmatprep.subr.mxu0 %v97
      %1467 = vmatpush1.msra.mxu0 %v96
      %1468 = vmatprep.subr.mxu0 %v101
      %1469 = vmatpush1.msra.mxu0 %v100
      %1470 = vmatprep.subr.mxu0 %v105
      %1471 = vmatpush1.msra.mxu0 %v104
      %1472 = vmatprep.subr.mxu0 %v109
      %1473 = vmatpush1.msra.mxu0 %v108
      %1474 = vmatprep.subr.mxu0 %v113
      %1475 = vmatpush1.msra.mxu0 %v112
      %1476 = vmatprep.subr.mxu0 %v117
      %1477 = vmatpush1.msra.mxu0 %v116
      %1478 = vmatprep.subr.mxu0 %v121
      %1479 = vmatpush1.msra.mxu0 %v120
      %1480 = vmatprep.subr.mxu0 %v125
      %1481 = vmatpush1.msra.mxu0 %v124
      %1482 = vmatprep.subr.mxu0 %v129
      %1483 = vmatpush1.msra.mxu0 %v128
      %1484 = vmatprep.subr.mxu0 0.0
      %1485 = vmatpush1.msra.mxu0 0.0
      %1486 = vmatprep.subr.mxu0 0.0
      %1487 = vmatpush1.msra.mxu0 0.0
      %1488 = vmatprep.subr.mxu0 0.0
      %1489 = vmatpush1.msra.mxu0 0.0
      %1490 = vmatprep.subr.mxu0 0.0
      %1491 = vmatpush1.msra.mxu0 0.0
      %1492 = vmatprep.subr.mxu0 0.0
      %1493 = vmatpush1.msra.mxu0 0.0
      %1494 = vmatprep.subr.mxu0 0.0
      %1495 = vmatpush1.msra.mxu0 0.0
      %1496 = vmatprep.subr.mxu0 0.0
      %1497 = vmatpush1.msra.mxu0 0.0
      %1498 = vmatprep.subr.mxu0 0.0
      %1499 = vmatpush1.msra.mxu0 0.0
      %1500 = vmatprep.subr.mxu0 0.0
      %1501 = vmatpush1.msra.mxu0 0.0
      %1502 = vmatprep.subr.mxu0 0.0
      %1503 = vmatpush1.msra.mxu0 0.0
      %1504 = vmatprep.subr.mxu0 0.0
      %1505 = vmatpush1.msra.mxu0 0.0
      %1506 = vmatprep.subr.mxu0 0.0
      %1507 = vmatpush1.msra.mxu0 0.0
      %1508 = vmatprep.subr.mxu0 0.0
      %1509 = vmatpush1.msra.mxu0 0.0
      %1510 = vmatprep.subr.mxu0 0.0
      %1511 = vmatpush1.msra.mxu0 0.0
      %1512 = vmatprep.subr.mxu0 0.0
      %1513 = vmatpush1.msra.mxu0 0.0
      %1514 = vmatprep.subr.mxu0 0.0
      %1515 = vmatpush1.msra.mxu0 0.0
      %1516 = vmatprep.mubr.f32.mxu0 0.0
      %1517 = vmatmul.mubr.f32.gmra.mrb[0].mxu0 %v1442
      %v1518 = vpop.f32.mrb[0].mxu0
      %v1519 = vadd.f32 0.0, %v1518
      %v1520 = vpop.f32.mrb[0].mxu0
      %v1521 = vadd.f32 0.0, %v1520
      %1522 = vdwg.mxu0
      %1523 = vmatprep.subr.mxu0 %v71
      %1524 = vmatpush1.msra.mxu0 %v70
      %1525 = vmatprep.subr.mxu0 %v75
      %1526 = vmatpush1.msra.mxu0 %v74
      %1527 = vmatprep.subr.mxu0 %v79
      %1528 = vmatpush1.msra.mxu0 %v78
      %1529 = vmatprep.subr.mxu0 %v83
      %1530 = vmatpush1.msra.mxu0 %v82
      %1531 = vmatprep.subr.mxu0 %v87
      %1532 = vmatpush1.msra.mxu0 %v86
      %1533 = vmatprep.subr.mxu0 %v91
      %1534 = vmatpush1.msra.mxu0 %v90
      %1535 = vmatprep.subr.mxu0 %v95
      %1536 = vmatpush1.msra.mxu0 %v94
      %1537 = vmatprep.subr.mxu0 %v99
      %1538 = vmatpush1.msra.mxu0 %v98
      %1539 = vmatprep.subr.mxu0 %v103
      %1540 = vmatpush1.msra.mxu0 %v102
      %1541 = vmatprep.subr.mxu0 %v107
      %1542 = vmatpush1.msra.mxu0 %v106
      %1543 = vmatprep.subr.mxu0 %v111
      %1544 = vmatpush1.msra.mxu0 %v110
      %1545 = vmatprep.subr.mxu0 %v115
      %1546 = vmatpush1.msra.mxu0 %v114
      %1547 = vmatprep.subr.mxu0 %v119
      %1548 = vmatpush1.msra.mxu0 %v118
      %1549 = vmatprep.subr.mxu0 %v123
      %1550 = vmatpush1.msra.mxu0 %v122
      %1551 = vmatprep.subr.mxu0 %v127
      %1552 = vmatpush1.msra.mxu0 %v126
      %1553 = vmatprep.subr.mxu0 %v131
      %1554 = vmatpush1.msra.mxu0 %v130
      %1555 = vmatprep.subr.mxu0 0.0
      %1556 = vmatpush1.msra.mxu0 0.0
      %1557 = vmatprep.subr.mxu0 0.0
      %1558 = vmatpush1.msra.mxu0 0.0
      %1559 = vmatprep.subr.mxu0 0.0
      %1560 = vmatpush1.msra.mxu0 0.0
      %1561 = vmatprep.subr.mxu0 0.0
      %1562 = vmatpush1.msra.mxu0 0.0
      %1563 = vmatprep.subr.mxu0 0.0
      %1564 = vmatpush1.msra.mxu0 0.0
      %1565 = vmatprep.subr.mxu0 0.0
      %1566 = vmatpush1.msra.mxu0 0.0
      %1567 = vmatprep.subr.mxu0 0.0
      %1568 = vmatpush1.msra.mxu0 0.0
      %1569 = vmatprep.subr.mxu0 0.0
      %1570 = vmatpush1.msra.mxu0 0.0
      %1571 = vmatprep.subr.mxu0 0.0
      %1572 = vmatpush1.msra.mxu0 0.0
      %1573 = vmatprep.subr.mxu0 0.0
      %1574 = vmatpush1.msra.mxu0 0.0
      %1575 = vmatprep.subr.mxu0 0.0
      %1576 = vmatpush1.msra.mxu0 0.0
      %1577 = vmatprep.subr.mxu0 0.0
      %1578 = vmatpush1.msra.mxu0 0.0
      %1579 = vmatprep.subr.mxu0 0.0
      %1580 = vmatpush1.msra.mxu0 0.0
      %1581 = vmatprep.subr.mxu0 0.0
      %1582 = vmatpush1.msra.mxu0 0.0
      %1583 = vmatprep.subr.mxu0 0.0
      %1584 = vmatpush1.msra.mxu0 0.0
      %1585 = vmatprep.subr.mxu0 0.0
      %1586 = vmatpush1.msra.mxu0 0.0
      %1587 = vmatprep.mubr.f32.mxu0 0.0
      %1588 = vmatmul.mubr.f32.gmra.mrb[0].mxu0 %v1442
      %v1589 = vpop.f32.mrb[0].mxu0
      %v1590 = vadd.f32 0.0, %v1589
      %v1591 = vpop.f32.mrb[0].mxu0
      %v1592 = vadd.f32 0.0, %v1591
      %1593 = vdwg.mxu0
      %v1594 = vadd.f32 %v1448, %v1519
      %v1595 = vadd.f32 %v1449, %v1521
      %v1596 = vadd.f32 %v1450, %v1590
      %v1597 = vadd.f32 %v1451, %v1592
      %v1598 = vxor.u32 %v1594, 2147483648
      %v1599 = vxor.u32 %v1595, 2147483648
      %v1600 = vxor.u32 %v1596, 2147483648
      %v1601 = vmul.f32 %v1598, 1.442695
      %v1602 = vpow.pop %v1601
      %v1603 = vmul.f32 %v1599, 1.442695
      %v1604 = vpow.pop %v1603
      %v1605 = vmul.f32 %v1600, 1.442695
      %v1606 = vpow.pop %v1605
      %v1607 = vadd.f32 %v1602, 1.0
      %v1608 = vadd.f32 %v1604, 1.0
      %v1609 = vadd.f32 %v1606, 1.0
      %v1610 = vrcp.pop %v1607
      %v1611 = vmul.f32 1.0, %v1610
      %v1612 = vrcp.pop %v1608
      %v1613 = vmul.f32 1.0, %v1612
      %v1614 = vrcp.pop %v1609
      %v1615 = vmul.f32 1.0, %v1614
      %v1616 = vtanh.pop %v1597
      %v1617 = vmul.f32 %v1613, %v1443
      %v1618 = vmul.f32 %v1611, %v1616
      %v1619 = vadd.f32 %v1617, %v1618
      %v1620 = vtanh.pop %v1619
      %v1621 = vmul.f32 %v1615, %v1620
      %s1622 = sadd.s32 %s54, 7
      %v1623 = vstv %s1622
      %vm1624 = vcmp.lt.s32.totalorder %v1623, %v67
      %v1625 = vsel %vm1624, 1, 0
      %1626 = vset.pattern.permute.xlu0 0
      %1627 = vperm.xlu0 %1626, %v1625
      %v1628 = vpop.permute.xlu0 %1627
      %vm1629 = vcmp.eq.s32.totalorder %v1628, 1
      %v1630 = vsel %vm1629, %v1621, %v1442
      %v1631 = vsel %vm1629, %v1619, %v1443
      %v1632 = vsel %vm1629, %v1621, 0.0
      %s1633 = scalar_lea.vmem [#allocation9], 56
      %1634 = vst [vmem:[%s1633] sm:$0xff] %v1632
      %1635 = vst [vmem:[#allocation10] sm:$0xff] %v1630
      %1636 = vst [vmem:[#allocation12] sm:$0xff] %v1631
    $region29: #{tpu_custom_call.1} parent=1 // pred_fallthru
      _
    %p1637 = scmp.ge.s32.totalorder %s54, %s62
    // Predicated region
    $region30: #{tpu_custom_call.1} parent=1 // pred_check
      %p1638 = pneg %p1637
    $region31: #{tpu_custom_call.1} parent=1 // pred_check_branch
      %1640 = sbr.rel (%p1638) target = $region33
    $region32: #{tpu_custom_call.1} parent=1 // pred_region
      %1641 = vst [vmem:[#allocation9] sm:$0xff] 0.0
      %1642 = vst [vmem:[#allocation9 + $0x8] sm:$0xff] 0.0
      %1643 = vst [vmem:[#allocation9 + $0x10] sm:$0xff] 0.0
      %1644 = vst [vmem:[#allocation9 + $0x18] sm:$0xff] 0.0
      %1645 = vst [vmem:[#allocation9 + $0x20] sm:$0xff] 0.0
      %1646 = vst [vmem:[#allocation9 + $0x28] sm:$0xff] 0.0
      %1647 = vst [vmem:[#allocation9 + $0x30] sm:$0xff] 0.0
      %1648 = vst [vmem:[#allocation9 + $0x38] sm:$0xff] 0.0
    $region33: #{tpu_custom_call.1} parent=1 // pred_fallthru
      _
    // Predicated region
    $region34: #{tpu_custom_call.1} parent=1 // pred_check
      _
    $region35: #{tpu_custom_call.1} parent=1 // pred_check_branch
      %1650 = sbr.rel (0) target = $region37
    $region36: #{tpu_custom_call.1} parent=1 // pred_region
      %s1652 = ssub.s32 1024, 1024
      %1653 = vsyncadd [#allocation6], %s1652
      %s1654 = sshll.u32 [#allocation9], 4
      %s1655 = int_to_ptr.vmem [resolvable:$true] %s1654
      %1660 = dma.vmem_to_hbm [thread:$0]  %s1655, 1024, %s4, [#allocation6], 128, 128, 8
    $region37: #{tpu_custom_call.1} parent=1 // pred_fallthru
      _
    // Predicated region
    $region38: #{tpu_custom_call.1} parent=1 // pred_check
      _
    $region39: #{tpu_custom_call.1} parent=1 // pred_check_branch
      %1662 = sbr.rel (0) target = $region41
    $region40: #{tpu_custom_call.1} parent=1 // pred_region
      %s1664 = ssub.s32 128, 128
      %1665 = vsyncadd [#allocation11], %s1664
      %s1667 = sshll.u32 [#allocation10], 4
      %s1668 = int_to_ptr.vmem [resolvable:$true] %s1667
      %1670 = dma.vmem_to_hbm [thread:$0]  %s1668, 128, %s5, [#allocation11]
    $region41: #{tpu_custom_call.1} parent=1 // pred_fallthru
      _
    // Predicated region
    $region42: #{tpu_custom_call.1} parent=1 // pred_check
      _
    $region43: #{tpu_custom_call.1} parent=1 // pred_check_branch
      %1672 = sbr.rel (0) target = $region45
    $region44: #{tpu_custom_call.1} parent=1 // pred_region
      %s1674 = ssub.s32 128, 128
      %1675 = vsyncadd [#allocation11], %s1674
      %s1677 = sshll.u32 [#allocation12], 4
      %s1678 = int_to_ptr.vmem [resolvable:$true] %s1677
      %1680 = dma.vmem_to_hbm [thread:$0]  %s1678, 128, %s6, [#allocation11]
    $region45: #{tpu_custom_call.1} parent=1 // pred_fallthru
      _
    // Predicated region
    $region46: #{tpu_custom_call.1} parent=1 // pred_check
      _
    $region47: #{tpu_custom_call.1} parent=1 // pred_check_branch
      %1682 = sbr.rel (0) target = $region49
    $region48: #{tpu_custom_call.1} parent=1 // pred_region
      %1683 = dma.done [#allocation6], 1024
    $region49: #{tpu_custom_call.1} parent=1 // pred_fallthru
      _
    // Predicated region
    $region50: #{tpu_custom_call.1} parent=1 // pred_check
      _
    $region51: #{tpu_custom_call.1} parent=1 // pred_check_branch
      %1685 = sbr.rel (0) target = $region53
    $region52: #{tpu_custom_call.1} parent=1 // pred_region
      %1686 = dma.done [#allocation11], 128
    $region53: #{tpu_custom_call.1} parent=1 // pred_fallthru
      _
    // Predicated region
    $region54: #{tpu_custom_call.1} parent=1 // pred_check
      _
    $region55: #{tpu_custom_call.1} parent=1 // pred_check_branch
      %1688 = sbr.rel (0) target = $region57
    $region56: #{tpu_custom_call.1} parent=1 // pred_region
      %1689 = dma.done [#allocation11], 128
    $region57: #{tpu_custom_call.1} parent=1 // pred_fallthru
      _
    %1690 = vsyncpa [#allocation5], 1
    %1691 = vsyncpa [#allocation8], 1
    %1692 = vsyncpa [#allocation6], 1
    %1693 = vsyncpa [#allocation11], 1

</llo_original>
